<compile_context>
chip_gen: v5e
topology: v5e:2x2
jax: 0.10.0
libtpu: 0.0.40
codegen_flags: <defaults>
</compile_context>

<pallas_src>
import functools
import math

import numpy as np
import jax
import jax.numpy as jnp
from jax.experimental import pallas as pl
from jax.experimental.pallas import tpu as pltpu  # noqa: F401  (TPU backend import)

LN_EPS = 1e-5
LANE = 128  # lane-dense feature width


# --------------------------------------------------------------------------------------
# Static layout shared between the packer and the kernel
# --------------------------------------------------------------------------------------
def _layout(in_features, hidden_dims):
    F = in_features
    assert F <= LANE and max(hidden_dims) <= LANE, "dims must fit in one lane tile"

    structure = []
    prev = F
    for d in hidden_dims:
        structure.append(("fc", prev, d))
        structure.append(("res", d))
        prev = d
    structure.append(("res", prev))                       # mid block
    for d in reversed(hidden_dims):
        structure.append(("fc", prev, d))
        structure.append(("res", d))
        prev = d
    structure.append(("fc", prev, F))                     # fc_out

    off = 0

    def take(nrows):
        nonlocal off
        r = off
        off += nrows
        return r

    temb = {"w0": take(LANE), "w1": take(LANE), "vec": take(8)}
    layers = []
    tcol = 0
    res_dims = []
    for entry in structure:
        if entry[0] == "fc":
            _, din, dout = entry
            layers.append({"kind": "fc", "din": din, "dout": dout,
                           "w": take(LANE), "vec": take(8)})
        else:
            d = entry[1]
            layers.append({"kind": "res", "d": d,
                           "w1": take(LANE), "w2": take(LANE), "vec": take(8),
                           "tcol": tcol})
            tcol += LANE
            res_dims.append(d)

    return {"F": F, "temb": temb, "layers": layers, "rows": off,
            "n_res": len(res_dims), "res_dims": tuple(res_dims)}


# --------------------------------------------------------------------------------------
# Fused Pallas kernel (whole forward in one call)
# --------------------------------------------------------------------------------------
def _make_kernel(layout):
    F = layout["F"]

    def silu(v):
        return v * jax.nn.sigmoid(v)

    def layernorm(h, g, b, inv_d):
        # single-pass reduction: one sweep produces sum(h) and sum(h*h)
        s1 = jnp.sum(h, axis=-1, keepdims=True)
        s2 = jnp.sum(h * h, axis=-1, keepdims=True)
        mu = s1 * inv_d
        var = s2 * inv_d - mu * mu
        return (h - mu) * jax.lax.rsqrt(var + LN_EPS) * g + b

    def mm(a, w):
        return jnp.dot(a, w, preferred_element_type=jnp.float32)

    def kernel(x_ref, e_ref, p_ref, tw_ref, o_ref):
        tl = layout["temb"]

        # ---- timestep-embedding MLP: Linear -> SiLU -> Linear, SiLU(temb) once ----
        w0 = p_ref[tl["w0"]:tl["w0"] + LANE, :]
        w1 = p_ref[tl["w1"]:tl["w1"] + LANE, :]
        b0 = p_ref[tl["vec"]:tl["vec"] + 1, :]
        b1 = p_ref[tl["vec"] + 1:tl["vec"] + 2, :]

        temb = mm(e_ref[...].astype(jnp.float32), w0) + b0
        temb = silu(temb)
        temb = mm(temb, w1) + b1
        temb_act = silu(temb)                                   # shared by all resblocks

        # ---- all resblock temb projections fused into one matmul ----
        wt_all = tw_ref[0:LANE, :]                              # [128, 128*n_res]
        bt_all = tw_ref[LANE:LANE + 1, :]
        temb_proj_all = mm(temb_act, wt_all) + bt_all           # [B, 128*n_res]

        x = x_ref[...].astype(jnp.float32)
        for L in layout["layers"]:
            if L["kind"] == "fc":
                w = p_ref[L["w"]:L["w"] + LANE, :]
                b = p_ref[L["vec"]:L["vec"] + 1, :]
                x = mm(x, w) + b
            else:
                inv_d = jnp.float32(1.0 / L["d"])
                v = L["vec"]
                g1 = p_ref[v:v + 1, :]
                be1 = p_ref[v + 1:v + 2, :]
                bb1 = p_ref[v + 2:v + 3, :]
                g2 = p_ref[v + 3:v + 4, :]
                be2 = p_ref[v + 4:v + 5, :]
                bb2 = p_ref[v + 5:v + 6, :]
                w1_ = p_ref[L["w1"]:L["w1"] + LANE, :]
                w2_ = p_ref[L["w2"]:L["w2"] + LANE, :]

                h = layernorm(x, g1, be1, inv_d)
                h = silu(h)
                h = mm(h, w1_) + bb1
                h = h + temb_proj_all[:, L["tcol"]:L["tcol"] + LANE]
                h = layernorm(h, g2, be2, inv_d)
                h = silu(h)
                # dropout: identity (p=0.0 / inference)
                h = mm(h, w2_) + bb2
                x = x + h                                        # in == out features

        o_ref[...] = x.astype(o_ref.dtype)

    return kernel


@functools.partial(jax.jit, static_argnames=("in_features", "hidden_dims"))
def diffcdr_forward(packed, x, t, context=None, *, in_features, hidden_dims):
    """Whole DiffCDR forward in a single fused, lane-dense Pallas kernel."""
    F = in_features
    if context is not None:
        x = x + context
    B = x.shape[0]

    # sinusoidal timestep embedding (tiny; fused by XLA) padded to 128 lanes
    emb = get_timestep_embedding(t, F)
    emb_pad = jnp.pad(emb.astype(jnp.float32), ((0, 0), (0, LANE - F)))
    x_pad = jnp.pad(x.astype(jnp.float32), ((0, 0), (0, LANE - F)))

    layout = _layout(in_features, tuple(hidden_dims))
    kernel = _make_kernel(layout)
    out = pl.pallas_call(
        kernel,
        out_shape=jax.ShapeDtypeStruct((B, LANE), x.dtype),
    )(x_pad, emb_pad, packed["p"], packed["tw"])
    return out[:, :F]


# --------------------------------------------------------------------------------------
# Parameter init / packing (plain numpy/JAX, done once outside jit)
# --------------------------------------------------------------------------------------
def get_timestep_embedding(timesteps, embedding_dim: int):
    assert timesteps.ndim == 1
    assert embedding_dim % 2 == 0
    half_dim = embedding_dim // 2
    emb = math.log(10000) / (half_dim - 1)
    emb = jnp.exp(jnp.arange(half_dim, dtype=jnp.float32) * -emb)
    emb = timesteps.astype(jnp.float32)[:, None] * emb[None, :]
    return jnp.concatenate([jnp.sin(emb), jnp.cos(emb)], axis=1)


def init_linear(key, din, dout):
    k1, k2 = jax.random.split(key)
    bound = 1.0 / math.sqrt(din)
    return {
        "w": jax.random.uniform(k1, (din, dout), jnp.float32, -bound, bound),
        "b": jax.random.uniform(k2, (1, dout), jnp.float32, -bound, bound),
    }


def init_resblock(key, dim, temb_dim):
    k1, k2, k3 = jax.random.split(key, 3)
    fc1 = init_linear(k1, dim, dim)
    tp = init_linear(k2, temb_dim, dim)
    fc2 = init_linear(k3, dim, dim)
    return {
        "g1": jnp.ones((1, dim), jnp.float32), "be1": jnp.zeros((1, dim), jnp.float32),
        "w1": fc1["w"], "b1": fc1["b"],
        "wt": tp["w"], "bt": tp["b"],
        "g2": jnp.ones((1, dim), jnp.float32), "be2": jnp.zeros((1, dim), jnp.float32),
        "w2": fc2["w"], "b2": fc2["b"],
    }


def init_diffcdr(key, in_features, hidden_dims):
    keys = iter(jax.random.split(key, 4 + 4 * len(hidden_dims) + 4))
    params = {
        "temb0": init_linear(next(keys), in_features, in_features),
        "temb1": init_linear(next(keys), in_features, in_features),
        "fc_down": [], "down_res": [], "fc_up": [], "up_res": [],
    }
    prev = in_features
    for dim in hidden_dims:
        params["fc_down"].append(init_linear(next(keys), prev, dim))
        params["down_res"].append(init_resblock(next(keys), dim, in_features))
        prev = dim
    params["mid"] = init_resblock(next(keys), prev, in_features)
    for dim in reversed(hidden_dims):
        params["fc_up"].append(init_linear(next(keys), prev, dim))
        params["up_res"].append(init_resblock(next(keys), dim, in_features))
        prev = dim
    params["fc_out"] = init_linear(next(keys), prev, in_features)
    # NOTE: layer1 / output_layer / tanh / dropout1 and the diffusion schedule buffers
    # exist in __init__ but are unused in DiffCDR.forward, so they are omitted here.
    return params


def pack_params(params, in_features, hidden_dims):
    """Pack everything into one lane-dense [R,128] blob + one [136, 128*n_res] temb-proj blob."""
    lay = _layout(in_features, tuple(hidden_dims))
    P = np.zeros((lay["rows"], LANE), np.float32)
    TW = np.zeros((LANE + 8, LANE * lay["n_res"]), np.float32)

    def put_w(off, w):
        w = np.asarray(w, np.float32)
        P[off:off + w.shape[0], :w.shape[1]] = w

    def put_row(off, row, v):
        v = np.asarray(v, np.float32).reshape(-1)
        P[off + row, :v.shape[0]] = v

    tl = lay["temb"]
    put_w(tl["w0"], params["temb0"]["w"])
    put_w(tl["w1"], params["temb1"]["w"])
    put_row(tl["vec"], 0, params["temb0"]["b"])
    put_row(tl["vec"], 1, params["temb1"]["b"])

    fc_list = list(params["fc_down"]) + list(params["fc_up"]) + [params["fc_out"]]
    rb_list = list(params["down_res"]) + [params["mid"]] + list(params["up_res"])
    fc_iter, rb_iter = iter(fc_list), iter(rb_list)
    ri = 0
    for L in lay["layers"]:
        if L["kind"] == "fc":
            p = next(fc_iter)
            put_w(L["w"], p["w"])
            put_row(L["vec"], 0, p["b"])
        else:
            p = next(rb_iter)
            put_w(L["w1"], p["w1"])
            put_w(L["w2"], p["w2"])
            put_row(L["vec"], 0, p["g1"])
            put_row(L["vec"], 1, p["be1"])
            put_row(L["vec"], 2, p["b1"])
            put_row(L["vec"], 3, p["g2"])
            put_row(L["vec"], 4, p["be2"])
            put_row(L["vec"], 5, p["b2"])
            wt = np.asarray(p["wt"], np.float32)                 # (F, d)
            bt = np.asarray(p["bt"], np.float32).reshape(-1)     # (d,)
            TW[:wt.shape[0], ri * LANE: ri * LANE + wt.shape[1]] = wt
            TW[LANE, ri * LANE: ri * LANE + bt.shape[0]] = bt
            ri += 1

    return {"p": jnp.asarray(P), "tw": jnp.asarray(TW)}


# --------------------------------------------------------------------------------------
# Pure-JAX reference (for correctness check)
# --------------------------------------------------------------------------------------
def _ref_linear(x, p, pre_silu=False):
    if pre_silu:
        x = x * jax.nn.sigmoid(x)
    return x @ p["w"] + p["b"]


def _ref_ln(h, g, b):
    mu = jnp.mean(h, axis=-1, keepdims=True)
    var = jnp.mean((h - mu) ** 2, axis=-1, keepdims=True)
    return (h - mu) / jnp.sqrt(var + LN_EPS) * g + b


def _ref_resblock(x, temb, p):
    h = _ref_ln(x, p["g1"], p["be1"])
    h = h * jax.nn.sigmoid(h)
    h = h @ p["w1"] + p["b1"]
    te = temb * jax.nn.sigmoid(temb)
    h = h + te @ p["wt"] + p["bt"]
    h = _ref_ln(h, p["g2"], p["be2"])
    h = h * jax.nn.sigmoid(h)
    h = h @ p["w2"] + p["b2"]
    return x + h


def _ref_forward(params, x, t, in_features, context=None):
    if context is not None:
        x = x + context
    temb = get_timestep_embedding(t, in_features)
    temb = _ref_linear(temb, params["temb0"])
    temb = _ref_linear(temb, params["temb1"], pre_silu=True)
    for fc, rb in zip(params["fc_down"], params["down_res"]):
        x = _ref_resblock(_ref_linear(x, fc), temb, rb)
    x = _ref_resblock(x, temb, params["mid"])
    for fc, rb in zip(params["fc_up"], params["up_res"]):
        x = _ref_resblock(_ref_linear(x, fc), temb, rb)
    return _ref_linear(x, params["fc_out"])


# --------------------------------------------------------------------------------------
if __name__ == "__main__":
    B = 8
    in_features = 32
    hidden_dims = (64, 32)
    num_steps = 100

    root = jax.random.PRNGKey(0)
    kp, kx, kc, kt = jax.random.split(root, 4)

    params = init_diffcdr(kp, in_features, hidden_dims)
    packed = pack_params(params, in_features, hidden_dims)

    x = jax.random.normal(kx, (B, in_features), jnp.float32)
    context = jax.random.normal(kc, (B, in_features), jnp.float32)
    t = jax.random.randint(kt, (B,), 0, num_steps, dtype=jnp.int32)

    out = diffcdr_forward(packed, x, t, context=context,
                          in_features=in_features, hidden_dims=hidden_dims)
    out = jax.block_until_ready(out)

    ref = _ref_forward(params, x, t, in_features, context=context)
    assert out.shape == (B, in_features)
    assert jnp.allclose(out, ref, atol=1e-3, rtol=1e-3), "Pallas output mismatch vs reference"

    print("KERNEL_OK")
</pallas_src>

<mosaic_0001>
module attributes {stable_mosaic.version = 11 : i64} {
  func.func @kernel(%arg0: memref<8x128xf32, #tpu.memory_space<vmem>>, %arg1: memref<8x128xf32, #tpu.memory_space<vmem>>, %arg2: memref<2264x128xf32, #tpu.memory_space<vmem>>, %arg3: memref<136x640xf32, #tpu.memory_space<vmem>>, %arg4: memref<8x128xf32, #tpu.memory_space<vmem>>) attributes {dimension_semantics = [], scalar_prefetch = 0 : i64, scratch_operands = 0 : i64, tpu.core_type = #tpu.core_type<tc>} {
    %c0 = arith.constant 0 : index
    %c0_0 = arith.constant 0 : index
    %0 = vector.load %arg2[%c0, %c0_0] : memref<2264x128xf32, #tpu.memory_space<vmem>>, vector<128x128xf32>
    %c128 = arith.constant 128 : index
    %c0_1 = arith.constant 0 : index
    %1 = vector.load %arg2[%c128, %c0_1] : memref<2264x128xf32, #tpu.memory_space<vmem>>, vector<128x128xf32>
    %c256 = arith.constant 256 : index
    %c0_2 = arith.constant 0 : index
    %2 = vector.load %arg2[%c256, %c0_2] : memref<2264x128xf32, #tpu.memory_space<vmem>>, vector<1x128xf32>
    %c257 = arith.constant 257 : index
    %c0_3 = arith.constant 0 : index
    %3 = vector.load %arg2[%c257, %c0_3] : memref<2264x128xf32, #tpu.memory_space<vmem>>, vector<1x128xf32>
    %c0_4 = arith.constant 0 : index
    %c0_5 = arith.constant 0 : index
    %4 = vector.load %arg1[%c0_4, %c0_5] : memref<8x128xf32, #tpu.memory_space<vmem>>, vector<8x128xf32>
    %cst = arith.constant dense<0.000000e+00> : vector<8x128xf32>
    %5 = tpu.matmul %4, %0, %cst {dimension_numbers = #tpu.dot_dimension_numbers<[1], [0], [0], [1], [0, 0, 1, 1], [], []>} : vector<8x128xf32>, vector<128x128xf32>, vector<8x128xf32> -> vector<8x128xf32>
    %6 = vector.broadcast %2 : vector<1x128xf32> to vector<8x128xf32>
    %7 = arith.addf %5, %6 : vector<8x128xf32>
    %8 = arith.negf %7 : vector<8x128xf32>
    %9 = math.exp %8 : vector<8x128xf32>
    %cst_6 = arith.constant 1.000000e+00 : f32
    %10 = vector.broadcast %cst_6 : f32 to vector<8x128xf32>
    %11 = arith.addf %10, %9 : vector<8x128xf32>
    %12 = arith.divf %10, %11 : vector<8x128xf32>
    %13 = arith.mulf %7, %12 : vector<8x128xf32>
    %cst_7 = arith.constant dense<0.000000e+00> : vector<8x128xf32>
    %14 = tpu.matmul %13, %1, %cst_7 {dimension_numbers = #tpu.dot_dimension_numbers<[1], [0], [0], [1], [0, 0, 1, 1], [], []>} : vector<8x128xf32>, vector<128x128xf32>, vector<8x128xf32> -> vector<8x128xf32>
    %15 = vector.broadcast %3 : vector<1x128xf32> to vector<8x128xf32>
    %16 = arith.addf %14, %15 : vector<8x128xf32>
    %17 = arith.negf %16 : vector<8x128xf32>
    %18 = math.exp %17 : vector<8x128xf32>
    %cst_8 = arith.constant 1.000000e+00 : f32
    %19 = vector.broadcast %cst_8 : f32 to vector<8x128xf32>
    %20 = arith.addf %19, %18 : vector<8x128xf32>
    %21 = arith.divf %19, %20 : vector<8x128xf32>
    %22 = arith.mulf %16, %21 : vector<8x128xf32>
    %c0_9 = arith.constant 0 : index
    %c0_10 = arith.constant 0 : index
    %23 = vector.load %arg3[%c0_9, %c0_10] : memref<136x640xf32, #tpu.memory_space<vmem>>, vector<128x640xf32>
    %c128_11 = arith.constant 128 : index
    %c0_12 = arith.constant 0 : index
    %24 = vector.load %arg3[%c128_11, %c0_12] : memref<136x640xf32, #tpu.memory_space<vmem>>, vector<1x640xf32>
    %cst_13 = arith.constant dense<0.000000e+00> : vector<8x640xf32>
    %25 = tpu.matmul %22, %23, %cst_13 {dimension_numbers = #tpu.dot_dimension_numbers<[1], [0], [0], [1], [0, 0, 1, 1], [], []>} : vector<8x128xf32>, vector<128x640xf32>, vector<8x640xf32> -> vector<8x640xf32>
    %26 = vector.broadcast %24 : vector<1x640xf32> to vector<8x640xf32>
    %27 = arith.addf %25, %26 : vector<8x640xf32>
    %c0_14 = arith.constant 0 : index
    %c0_15 = arith.constant 0 : index
    %28 = vector.load %arg0[%c0_14, %c0_15] : memref<8x128xf32, #tpu.memory_space<vmem>>, vector<8x128xf32>
    %c264 = arith.constant 264 : index
    %c0_16 = arith.constant 0 : index
    %29 = vector.load %arg2[%c264, %c0_16] : memref<2264x128xf32, #tpu.memory_space<vmem>>, vector<128x128xf32>
    %c392 = arith.constant 392 : index
    %c0_17 = arith.constant 0 : index
    %30 = vector.load %arg2[%c392, %c0_17] : memref<2264x128xf32, #tpu.memory_space<vmem>>, vector<1x128xf32>
    %cst_18 = arith.constant dense<0.000000e+00> : vector<8x128xf32>
    %31 = tpu.matmul %28, %29, %cst_18 {dimension_numbers = #tpu.dot_dimension_numbers<[1], [0], [0], [1], [0, 0, 1, 1], [], []>} : vector<8x128xf32>, vector<128x128xf32>, vector<8x128xf32> -> vector<8x128xf32>
    %32 = vector.broadcast %30 : vector<1x128xf32> to vector<8x128xf32>
    %33 = arith.addf %31, %32 : vector<8x128xf32>
    %c656 = arith.constant 656 : index
    %c0_19 = arith.constant 0 : index
    %34 = vector.load %arg2[%c656, %c0_19] : memref<2264x128xf32, #tpu.memory_space<vmem>>, vector<1x128xf32>
    %c657 = arith.constant 657 : index
    %c0_20 = arith.constant 0 : index
    %35 = vector.load %arg2[%c657, %c0_20] : memref<2264x128xf32, #tpu.memory_space<vmem>>, vector<1x128xf32>
    %c658 = arith.constant 658 : index
    %c0_21 = arith.constant 0 : index
    %36 = vector.load %arg2[%c658, %c0_21] : memref<2264x128xf32, #tpu.memory_space<vmem>>, vector<1x128xf32>
    %c659 = arith.constant 659 : index
    %c0_22 = arith.constant 0 : index
    %37 = vector.load %arg2[%c659, %c0_22] : memref<2264x128xf32, #tpu.memory_space<vmem>>, vector<1x128xf32>
    %c660 = arith.constant 660 : index
    %c0_23 = arith.constant 0 : index
    %38 = vector.load %arg2[%c660, %c0_23] : memref<2264x128xf32, #tpu.memory_space<vmem>>, vector<1x128xf32>
    %c661 = arith.constant 661 : index
    %c0_24 = arith.constant 0 : index
    %39 = vector.load %arg2[%c661, %c0_24] : memref<2264x128xf32, #tpu.memory_space<vmem>>, vector<1x128xf32>
    %c400 = arith.constant 400 : index
    %c0_25 = arith.constant 0 : index
    %40 = vector.load %arg2[%c400, %c0_25] : memref<2264x128xf32, #tpu.memory_space<vmem>>, vector<128x128xf32>
    %c528 = arith.constant 528 : index
    %c0_26 = arith.constant 0 : index
    %41 = vector.load %arg2[%c528, %c0_26] : memref<2264x128xf32, #tpu.memory_space<vmem>>, vector<128x128xf32>
    %cst_27 = arith.constant dense<0.000000e+00> : vector<8xf32>
    %42 = vector.multi_reduction <add>, %33, %cst_27 [1] : vector<8x128xf32> to vector<8xf32>
    %43 = vector.shape_cast %42 : vector<8xf32> to vector<8x1xf32>
    %44 = arith.mulf %33, %33 : vector<8x128xf32>
    %cst_28 = arith.constant dense<0.000000e+00> : vector<8xf32>
    %45 = vector.multi_reduction <add>, %44, %cst_28 [1] : vector<8x128xf32> to vector<8xf32>
    %46 = vector.shape_cast %45 : vector<8xf32> to vector<8x1xf32>
    %cst_29 = arith.constant 1.562500e-02 : f32
    %47 = vector.broadcast %cst_29 : f32 to vector<8x1xf32>
    %48 = arith.mulf %43, %47 : vector<8x1xf32>
    %cst_30 = arith.constant 1.562500e-02 : f32
    %49 = vector.broadcast %cst_30 : f32 to vector<8x1xf32>
    %50 = arith.mulf %46, %49 : vector<8x1xf32>
    %51 = arith.mulf %48, %48 : vector<8x1xf32>
    %52 = arith.subf %50, %51 : vector<8x1xf32>
    %53 = vector.broadcast %48 : vector<8x1xf32> to vector<8x128xf32>
    %54 = arith.subf %33, %53 : vector<8x128xf32>
    %cst_31 = arith.constant 9.99999974E-6 : f32
    %55 = vector.broadcast %cst_31 : f32 to vector<8x1xf32>
    %56 = arith.addf %52, %55 : vector<8x1xf32>
    %57 = math.rsqrt %56 : vector<8x1xf32>
    %58 = vector.broadcast %57 : vector<8x1xf32> to vector<8x128xf32>
    %59 = arith.mulf %54, %58 : vector<8x128xf32>
    %60 = vector.broadcast %34 : vector<1x128xf32> to vector<8x128xf32>
    %61 = arith.mulf %59, %60 : vector<8x128xf32>
    %62 = vector.broadcast %35 : vector<1x128xf32> to vector<8x128xf32>
    %63 = arith.addf %61, %62 : vector<8x128xf32>
    %64 = arith.negf %63 : vector<8x128xf32>
    %65 = math.exp %64 : vector<8x128xf32>
    %cst_32 = arith.constant 1.000000e+00 : f32
    %66 = vector.broadcast %cst_32 : f32 to vector<8x128xf32>
    %67 = arith.addf %66, %65 : vector<8x128xf32>
    %68 = arith.divf %66, %67 : vector<8x128xf32>
    %69 = arith.mulf %63, %68 : vector<8x128xf32>
    %cst_33 = arith.constant dense<0.000000e+00> : vector<8x128xf32>
    %70 = tpu.matmul %69, %40, %cst_33 {dimension_numbers = #tpu.dot_dimension_numbers<[1], [0], [0], [1], [0, 0, 1, 1], [], []>} : vector<8x128xf32>, vector<128x128xf32>, vector<8x128xf32> -> vector<8x128xf32>
    %71 = vector.broadcast %36 : vector<1x128xf32> to vector<8x128xf32>
    %72 = arith.addf %70, %71 : vector<8x128xf32>
    %73 = vector.extract_strided_slice %27 {offsets = [0, 0], sizes = [8, 128], strides = [1, 1]} : vector<8x640xf32> to vector<8x128xf32>
    %74 = arith.addf %72, %73 : vector<8x128xf32>
    %cst_34 = arith.constant dense<0.000000e+00> : vector<8xf32>
    %75 = vector.multi_reduction <add>, %74, %cst_34 [1] : vector<8x128xf32> to vector<8xf32>
    %76 = vector.shape_cast %75 : vector<8xf32> to vector<8x1xf32>
    %77 = arith.mulf %74, %74 : vector<8x128xf32>
    %cst_35 = arith.constant dense<0.000000e+00> : vector<8xf32>
    %78 = vector.multi_reduction <add>, %77, %cst_35 [1] : vector<8x128xf32> to vector<8xf32>
    %79 = vector.shape_cast %78 : vector<8xf32> to vector<8x1xf32>
    %cst_36 = arith.constant 1.562500e-02 : f32
    %80 = vector.broadcast %cst_36 : f32 to vector<8x1xf32>
    %81 = arith.mulf %76, %80 : vector<8x1xf32>
    %cst_37 = arith.constant 1.562500e-02 : f32
    %82 = vector.broadcast %cst_37 : f32 to vector<8x1xf32>
    %83 = arith.mulf %79, %82 : vector<8x1xf32>
    %84 = arith.mulf %81, %81 : vector<8x1xf32>
    %85 = arith.subf %83, %84 : vector<8x1xf32>
    %86 = vector.broadcast %81 : vector<8x1xf32> to vector<8x128xf32>
    %87 = arith.subf %74, %86 : vector<8x128xf32>
    %cst_38 = arith.constant 9.99999974E-6 : f32
    %88 = vector.broadcast %cst_38 : f32 to vector<8x1xf32>
    %89 = arith.addf %85, %88 : vector<8x1xf32>
    %90 = math.rsqrt %89 : vector<8x1xf32>
    %91 = vector.broadcast %90 : vector<8x1xf32> to vector<8x128xf32>
    %92 = arith.mulf %87, %91 : vector<8x128xf32>
    %93 = vector.broadcast %37 : vector<1x128xf32> to vector<8x128xf32>
    %94 = arith.mulf %92, %93 : vector<8x128xf32>
    %95 = vector.broadcast %38 : vector<1x128xf32> to vector<8x128xf32>
    %96 = arith.addf %94, %95 : vector<8x128xf32>
    %97 = arith.negf %96 : vector<8x128xf32>
    %98 = math.exp %97 : vector<8x128xf32>
    %cst_39 = arith.constant 1.000000e+00 : f32
    %99 = vector.broadcast %cst_39 : f32 to vector<8x128xf32>
    %100 = arith.addf %99, %98 : vector<8x128xf32>
    %101 = arith.divf %99, %100 : vector<8x128xf32>
    %102 = arith.mulf %96, %101 : vector<8x128xf32>
    %cst_40 = arith.constant dense<0.000000e+00> : vector<8x128xf32>
    %103 = tpu.matmul %102, %41, %cst_40 {dimension_numbers = #tpu.dot_dimension_numbers<[1], [0], [0], [1], [0, 0, 1, 1], [], []>} : vector<8x128xf32>, vector<128x128xf32>, vector<8x128xf32> -> vector<8x128xf32>
    %104 = vector.broadcast %39 : vector<1x128xf32> to vector<8x128xf32>
    %105 = arith.addf %103, %104 : vector<8x128xf32>
    %106 = arith.addf %33, %105 : vector<8x128xf32>
    %c664 = arith.constant 664 : index
    %c0_41 = arith.constant 0 : index
    %107 = vector.load %arg2[%c664, %c0_41] : memref<2264x128xf32, #tpu.memory_space<vmem>>, vector<128x128xf32>
    %c792 = arith.constant 792 : index
    %c0_42 = arith.constant 0 : index
    %108 = vector.load %arg2[%c792, %c0_42] : memref<2264x128xf32, #tpu.memory_space<vmem>>, vector<1x128xf32>
    %cst_43 = arith.constant dense<0.000000e+00> : vector<8x128xf32>
    %109 = tpu.matmul %106, %107, %cst_43 {dimension_numbers = #tpu.dot_dimension_numbers<[1], [0], [0], [1], [0, 0, 1, 1], [], []>} : vector<8x128xf32>, vector<128x128xf32>, vector<8x128xf32> -> vector<8x128xf32>
    %110 = vector.broadcast %108 : vector<1x128xf32> to vector<8x128xf32>
    %111 = arith.addf %109, %110 : vector<8x128xf32>
    %c1056 = arith.constant 1056 : index
    %c0_44 = arith.constant 0 : index
    %112 = vector.load %arg2[%c1056, %c0_44] : memref<2264x128xf32, #tpu.memory_space<vmem>>, vector<1x128xf32>
    %c1057 = arith.constant 1057 : index
    %c0_45 = arith.constant 0 : index
    %113 = vector.load %arg2[%c1057, %c0_45] : memref<2264x128xf32, #tpu.memory_space<vmem>>, vector<1x128xf32>
    %c1058 = arith.constant 1058 : index
    %c0_46 = arith.constant 0 : index
    %114 = vector.load %arg2[%c1058, %c0_46] : memref<2264x128xf32, #tpu.memory_space<vmem>>, vector<1x128xf32>
    %c1059 = arith.constant 1059 : index
    %c0_47 = arith.constant 0 : index
    %115 = vector.load %arg2[%c1059, %c0_47] : memref<2264x128xf32, #tpu.memory_space<vmem>>, vector<1x128xf32>
    %c1060 = arith.constant 1060 : index
    %c0_48 = arith.constant 0 : index
    %116 = vector.load %arg2[%c1060, %c0_48] : memref<2264x128xf32, #tpu.memory_space<vmem>>, vector<1x128xf32>
    %c1061 = arith.constant 1061 : index
    %c0_49 = arith.constant 0 : index
    %117 = vector.load %arg2[%c1061, %c0_49] : memref<2264x128xf32, #tpu.memory_space<vmem>>, vector<1x128xf32>
    %c800 = arith.constant 800 : index
    %c0_50 = arith.constant 0 : index
    %118 = vector.load %arg2[%c800, %c0_50] : memref<2264x128xf32, #tpu.memory_space<vmem>>, vector<128x128xf32>
    %c928 = arith.constant 928 : index
    %c0_51 = arith.constant 0 : index
    %119 = vector.load %arg2[%c928, %c0_51] : memref<2264x128xf32, #tpu.memory_space<vmem>>, vector<128x128xf32>
    %cst_52 = arith.constant dense<0.000000e+00> : vector<8xf32>
    %120 = vector.multi_reduction <add>, %111, %cst_52 [1] : vector<8x128xf32> to vector<8xf32>
    %121 = vector.shape_cast %120 : vector<8xf32> to vector<8x1xf32>
    %122 = arith.mulf %111, %111 : vector<8x128xf32>
    %cst_53 = arith.constant dense<0.000000e+00> : vector<8xf32>
    %123 = vector.multi_reduction <add>, %122, %cst_53 [1] : vector<8x128xf32> to vector<8xf32>
    %124 = vector.shape_cast %123 : vector<8xf32> to vector<8x1xf32>
    %cst_54 = arith.constant 3.125000e-02 : f32
    %125 = vector.broadcast %cst_54 : f32 to vector<8x1xf32>
    %126 = arith.mulf %121, %125 : vector<8x1xf32>
    %cst_55 = arith.constant 3.125000e-02 : f32
    %127 = vector.broadcast %cst_55 : f32 to vector<8x1xf32>
    %128 = arith.mulf %124, %127 : vector<8x1xf32>
    %129 = arith.mulf %126, %126 : vector<8x1xf32>
    %130 = arith.subf %128, %129 : vector<8x1xf32>
    %131 = vector.broadcast %126 : vector<8x1xf32> to vector<8x128xf32>
    %132 = arith.subf %111, %131 : vector<8x128xf32>
    %cst_56 = arith.constant 9.99999974E-6 : f32
    %133 = vector.broadcast %cst_56 : f32 to vector<8x1xf32>
    %134 = arith.addf %130, %133 : vector<8x1xf32>
    %135 = math.rsqrt %134 : vector<8x1xf32>
    %136 = vector.broadcast %135 : vector<8x1xf32> to vector<8x128xf32>
    %137 = arith.mulf %132, %136 : vector<8x128xf32>
    %138 = vector.broadcast %112 : vector<1x128xf32> to vector<8x128xf32>
    %139 = arith.mulf %137, %138 : vector<8x128xf32>
    %140 = vector.broadcast %113 : vector<1x128xf32> to vector<8x128xf32>
    %141 = arith.addf %139, %140 : vector<8x128xf32>
    %142 = arith.negf %141 : vector<8x128xf32>
    %143 = math.exp %142 : vector<8x128xf32>
    %cst_57 = arith.constant 1.000000e+00 : f32
    %144 = vector.broadcast %cst_57 : f32 to vector<8x128xf32>
    %145 = arith.addf %144, %143 : vector<8x128xf32>
    %146 = arith.divf %144, %145 : vector<8x128xf32>
    %147 = arith.mulf %141, %146 : vector<8x128xf32>
    %cst_58 = arith.constant dense<0.000000e+00> : vector<8x128xf32>
    %148 = tpu.matmul %147, %118, %cst_58 {dimension_numbers = #tpu.dot_dimension_numbers<[1], [0], [0], [1], [0, 0, 1, 1], [], []>} : vector<8x128xf32>, vector<128x128xf32>, vector<8x128xf32> -> vector<8x128xf32>
    %149 = vector.broadcast %114 : vector<1x128xf32> to vector<8x128xf32>
    %150 = arith.addf %148, %149 : vector<8x128xf32>
    %151 = vector.extract_strided_slice %27 {offsets = [0, 128], sizes = [8, 128], strides = [1, 1]} : vector<8x640xf32> to vector<8x128xf32>
    %152 = arith.addf %150, %151 : vector<8x128xf32>
    %cst_59 = arith.constant dense<0.000000e+00> : vector<8xf32>
    %153 = vector.multi_reduction <add>, %152, %cst_59 [1] : vector<8x128xf32> to vector<8xf32>
    %154 = vector.shape_cast %153 : vector<8xf32> to vector<8x1xf32>
    %155 = arith.mulf %152, %152 : vector<8x128xf32>
    %cst_60 = arith.constant dense<0.000000e+00> : vector<8xf32>
    %156 = vector.multi_reduction <add>, %155, %cst_60 [1] : vector<8x128xf32> to vector<8xf32>
    %157 = vector.shape_cast %156 : vector<8xf32> to vector<8x1xf32>
    %cst_61 = arith.constant 3.125000e-02 : f32
    %158 = vector.broadcast %cst_61 : f32 to vector<8x1xf32>
    %159 = arith.mulf %154, %158 : vector<8x1xf32>
    %cst_62 = arith.constant 3.125000e-02 : f32
    %160 = vector.broadcast %cst_62 : f32 to vector<8x1xf32>
    %161 = arith.mulf %157, %160 : vector<8x1xf32>
    %162 = arith.mulf %159, %159 : vector<8x1xf32>
    %163 = arith.subf %161, %162 : vector<8x1xf32>
    %164 = vector.broadcast %159 : vector<8x1xf32> to vector<8x128xf32>
    %165 = arith.subf %152, %164 : vector<8x128xf32>
    %cst_63 = arith.constant 9.99999974E-6 : f32
    %166 = vector.broadcast %cst_63 : f32 to vector<8x1xf32>
    %167 = arith.addf %163, %166 : vector<8x1xf32>
    %168 = math.rsqrt %167 : vector<8x1xf32>
    %169 = vector.broadcast %168 : vector<8x1xf32> to vector<8x128xf32>
    %170 = arith.mulf %165, %169 : vector<8x128xf32>
    %171 = vector.broadcast %115 : vector<1x128xf32> to vector<8x128xf32>
    %172 = arith.mulf %170, %171 : vector<8x128xf32>
    %173 = vector.broadcast %116 : vector<1x128xf32> to vector<8x128xf32>
    %174 = arith.addf %172, %173 : vector<8x128xf32>
    %175 = arith.negf %174 : vector<8x128xf32>
    %176 = math.exp %175 : vector<8x128xf32>
    %cst_64 = arith.constant 1.000000e+00 : f32
    %177 = vector.broadcast %cst_64 : f32 to vector<8x128xf32>
    %178 = arith.addf %177, %176 : vector<8x128xf32>
    %179 = arith.divf %177, %178 : vector<8x128xf32>
    %180 = arith.mulf %174, %179 : vector<8x128xf32>
    %cst_65 = arith.constant dense<0.000000e+00> : vector<8x128xf32>
    %181 = tpu.matmul %180, %119, %cst_65 {dimension_numbers = #tpu.dot_dimension_numbers<[1], [0], [0], [1], [0, 0, 1, 1], [], []>} : vector<8x128xf32>, vector<128x128xf32>, vector<8x128xf32> -> vector<8x128xf32>
    %182 = vector.broadcast %117 : vector<1x128xf32> to vector<8x128xf32>
    %183 = arith.addf %181, %182 : vector<8x128xf32>
    %184 = arith.addf %111, %183 : vector<8x128xf32>
    %c1320 = arith.constant 1320 : index
    %c0_66 = arith.constant 0 : index
    %185 = vector.load %arg2[%c1320, %c0_66] : memref<2264x128xf32, #tpu.memory_space<vmem>>, vector<1x128xf32>
    %c1321 = arith.constant 1321 : index
    %c0_67 = arith.constant 0 : index
    %186 = vector.load %arg2[%c1321, %c0_67] : memref<2264x128xf32, #tpu.memory_space<vmem>>, vector<1x128xf32>
    %c1322 = arith.constant 1322 : index
    %c0_68 = arith.constant 0 : index
    %187 = vector.load %arg2[%c1322, %c0_68] : memref<2264x128xf32, #tpu.memory_space<vmem>>, vector<1x128xf32>
    %c1323 = arith.constant 1323 : index
    %c0_69 = arith.constant 0 : index
    %188 = vector.load %arg2[%c1323, %c0_69] : memref<2264x128xf32, #tpu.memory_space<vmem>>, vector<1x128xf32>
    %c1324 = arith.constant 1324 : index
    %c0_70 = arith.constant 0 : index
    %189 = vector.load %arg2[%c1324, %c0_70] : memref<2264x128xf32, #tpu.memory_space<vmem>>, vector<1x128xf32>
    %c1325 = arith.constant 1325 : index
    %c0_71 = arith.constant 0 : index
    %190 = vector.load %arg2[%c1325, %c0_71] : memref<2264x128xf32, #tpu.memory_space<vmem>>, vector<1x128xf32>
    %c1064 = arith.constant 1064 : index
    %c0_72 = arith.constant 0 : index
    %191 = vector.load %arg2[%c1064, %c0_72] : memref<2264x128xf32, #tpu.memory_space<vmem>>, vector<128x128xf32>
    %c1192 = arith.constant 1192 : index
    %c0_73 = arith.constant 0 : index
    %192 = vector.load %arg2[%c1192, %c0_73] : memref<2264x128xf32, #tpu.memory_space<vmem>>, vector<128x128xf32>
    %cst_74 = arith.constant dense<0.000000e+00> : vector<8xf32>
    %193 = vector.multi_reduction <add>, %184, %cst_74 [1] : vector<8x128xf32> to vector<8xf32>
    %194 = vector.shape_cast %193 : vector<8xf32> to vector<8x1xf32>
    %195 = arith.mulf %184, %184 : vector<8x128xf32>
    %cst_75 = arith.constant dense<0.000000e+00> : vector<8xf32>
    %196 = vector.multi_reduction <add>, %195, %cst_75 [1] : vector<8x128xf32> to vector<8xf32>
    %197 = vector.shape_cast %196 : vector<8xf32> to vector<8x1xf32>
    %cst_76 = arith.constant 3.125000e-02 : f32
    %198 = vector.broadcast %cst_76 : f32 to vector<8x1xf32>
    %199 = arith.mulf %194, %198 : vector<8x1xf32>
    %cst_77 = arith.constant 3.125000e-02 : f32
    %200 = vector.broadcast %cst_77 : f32 to vector<8x1xf32>
    %201 = arith.mulf %197, %200 : vector<8x1xf32>
    %202 = arith.mulf %199, %199 : vector<8x1xf32>
    %203 = arith.subf %201, %202 : vector<8x1xf32>
    %204 = vector.broadcast %199 : vector<8x1xf32> to vector<8x128xf32>
    %205 = arith.subf %184, %204 : vector<8x128xf32>
    %cst_78 = arith.constant 9.99999974E-6 : f32
    %206 = vector.broadcast %cst_78 : f32 to vector<8x1xf32>
    %207 = arith.addf %203, %206 : vector<8x1xf32>
    %208 = math.rsqrt %207 : vector<8x1xf32>
    %209 = vector.broadcast %208 : vector<8x1xf32> to vector<8x128xf32>
    %210 = arith.mulf %205, %209 : vector<8x128xf32>
    %211 = vector.broadcast %185 : vector<1x128xf32> to vector<8x128xf32>
    %212 = arith.mulf %210, %211 : vector<8x128xf32>
    %213 = vector.broadcast %186 : vector<1x128xf32> to vector<8x128xf32>
    %214 = arith.addf %212, %213 : vector<8x128xf32>
    %215 = arith.negf %214 : vector<8x128xf32>
    %216 = math.exp %215 : vector<8x128xf32>
    %cst_79 = arith.constant 1.000000e+00 : f32
    %217 = vector.broadcast %cst_79 : f32 to vector<8x128xf32>
    %218 = arith.addf %217, %216 : vector<8x128xf32>
    %219 = arith.divf %217, %218 : vector<8x128xf32>
    %220 = arith.mulf %214, %219 : vector<8x128xf32>
    %cst_80 = arith.constant dense<0.000000e+00> : vector<8x128xf32>
    %221 = tpu.matmul %220, %191, %cst_80 {dimension_numbers = #tpu.dot_dimension_numbers<[1], [0], [0], [1], [0, 0, 1, 1], [], []>} : vector<8x128xf32>, vector<128x128xf32>, vector<8x128xf32> -> vector<8x128xf32>
    %222 = vector.broadcast %187 : vector<1x128xf32> to vector<8x128xf32>
    %223 = arith.addf %221, %222 : vector<8x128xf32>
    %224 = vector.extract_strided_slice %27 {offsets = [0, 256], sizes = [8, 128], strides = [1, 1]} : vector<8x640xf32> to vector<8x128xf32>
    %225 = arith.addf %223, %224 : vector<8x128xf32>
    %cst_81 = arith.constant dense<0.000000e+00> : vector<8xf32>
    %226 = vector.multi_reduction <add>, %225, %cst_81 [1] : vector<8x128xf32> to vector<8xf32>
    %227 = vector.shape_cast %226 : vector<8xf32> to vector<8x1xf32>
    %228 = arith.mulf %225, %225 : vector<8x128xf32>
    %cst_82 = arith.constant dense<0.000000e+00> : vector<8xf32>
    %229 = vector.multi_reduction <add>, %228, %cst_82 [1] : vector<8x128xf32> to vector<8xf32>
    %230 = vector.shape_cast %229 : vector<8xf32> to vector<8x1xf32>
    %cst_83 = arith.constant 3.125000e-02 : f32
    %231 = vector.broadcast %cst_83 : f32 to vector<8x1xf32>
    %232 = arith.mulf %227, %231 : vector<8x1xf32>
    %cst_84 = arith.constant 3.125000e-02 : f32
    %233 = vector.broadcast %cst_84 : f32 to vector<8x1xf32>
    %234 = arith.mulf %230, %233 : vector<8x1xf32>
    %235 = arith.mulf %232, %232 : vector<8x1xf32>
    %236 = arith.subf %234, %235 : vector<8x1xf32>
    %237 = vector.broadcast %232 : vector<8x1xf32> to vector<8x128xf32>
    %238 = arith.subf %225, %237 : vector<8x128xf32>
    %cst_85 = arith.constant 9.99999974E-6 : f32
    %239 = vector.broadcast %cst_85 : f32 to vector<8x1xf32>
    %240 = arith.addf %236, %239 : vector<8x1xf32>
    %241 = math.rsqrt %240 : vector<8x1xf32>
    %242 = vector.broadcast %241 : vector<8x1xf32> to vector<8x128xf32>
    %243 = arith.mulf %238, %242 : vector<8x128xf32>
    %244 = vector.broadcast %188 : vector<1x128xf32> to vector<8x128xf32>
    %245 = arith.mulf %243, %244 : vector<8x128xf32>
    %246 = vector.broadcast %189 : vector<1x128xf32> to vector<8x128xf32>
    %247 = arith.addf %245, %246 : vector<8x128xf32>
    %248 = arith.negf %247 : vector<8x128xf32>
    %249 = math.exp %248 : vector<8x128xf32>
    %cst_86 = arith.constant 1.000000e+00 : f32
    %250 = vector.broadcast %cst_86 : f32 to vector<8x128xf32>
    %251 = arith.addf %250, %249 : vector<8x128xf32>
    %252 = arith.divf %250, %251 : vector<8x128xf32>
    %253 = arith.mulf %247, %252 : vector<8x128xf32>
    %cst_87 = arith.constant dense<0.000000e+00> : vector<8x128xf32>
    %254 = tpu.matmul %253, %192, %cst_87 {dimension_numbers = #tpu.dot_dimension_numbers<[1], [0], [0], [1], [0, 0, 1, 1], [], []>} : vector<8x128xf32>, vector<128x128xf32>, vector<8x128xf32> -> vector<8x128xf32>
    %255 = vector.broadcast %190 : vector<1x128xf32> to vector<8x128xf32>
    %256 = arith.addf %254, %255 : vector<8x128xf32>
    %257 = arith.addf %184, %256 : vector<8x128xf32>
    %c1328 = arith.constant 1328 : index
    %c0_88 = arith.constant 0 : index
    %258 = vector.load %arg2[%c1328, %c0_88] : memref<2264x128xf32, #tpu.memory_space<vmem>>, vector<128x128xf32>
    %c1456 = arith.constant 1456 : index
    %c0_89 = arith.constant 0 : index
    %259 = vector.load %arg2[%c1456, %c0_89] : memref<2264x128xf32, #tpu.memory_space<vmem>>, vector<1x128xf32>
    %cst_90 = arith.constant dense<0.000000e+00> : vector<8x128xf32>
    %260 = tpu.matmul %257, %258, %cst_90 {dimension_numbers = #tpu.dot_dimension_numbers<[1], [0], [0], [1], [0, 0, 1, 1], [], []>} : vector<8x128xf32>, vector<128x128xf32>, vector<8x128xf32> -> vector<8x128xf32>
    %261 = vector.broadcast %259 : vector<1x128xf32> to vector<8x128xf32>
    %262 = arith.addf %260, %261 : vector<8x128xf32>
    %c1720 = arith.constant 1720 : index
    %c0_91 = arith.constant 0 : index
    %263 = vector.load %arg2[%c1720, %c0_91] : memref<2264x128xf32, #tpu.memory_space<vmem>>, vector<1x128xf32>
    %c1721 = arith.constant 1721 : index
    %c0_92 = arith.constant 0 : index
    %264 = vector.load %arg2[%c1721, %c0_92] : memref<2264x128xf32, #tpu.memory_space<vmem>>, vector<1x128xf32>
    %c1722 = arith.constant 1722 : index
    %c0_93 = arith.constant 0 : index
    %265 = vector.load %arg2[%c1722, %c0_93] : memref<2264x128xf32, #tpu.memory_space<vmem>>, vector<1x128xf32>
    %c1723 = arith.constant 1723 : index
    %c0_94 = arith.constant 0 : index
    %266 = vector.load %arg2[%c1723, %c0_94] : memref<2264x128xf32, #tpu.memory_space<vmem>>, vector<1x128xf32>
    %c1724 = arith.constant 1724 : index
    %c0_95 = arith.constant 0 : index
    %267 = vector.load %arg2[%c1724, %c0_95] : memref<2264x128xf32, #tpu.memory_space<vmem>>, vector<1x128xf32>
    %c1725 = arith.constant 1725 : index
    %c0_96 = arith.constant 0 : index
    %268 = vector.load %arg2[%c1725, %c0_96] : memref<2264x128xf32, #tpu.memory_space<vmem>>, vector<1x128xf32>
    %c1464 = arith.constant 1464 : index
    %c0_97 = arith.constant 0 : index
    %269 = vector.load %arg2[%c1464, %c0_97] : memref<2264x128xf32, #tpu.memory_space<vmem>>, vector<128x128xf32>
    %c1592 = arith.constant 1592 : index
    %c0_98 = arith.constant 0 : index
    %270 = vector.load %arg2[%c1592, %c0_98] : memref<2264x128xf32, #tpu.memory_space<vmem>>, vector<128x128xf32>
    %cst_99 = arith.constant dense<0.000000e+00> : vector<8xf32>
    %271 = vector.multi_reduction <add>, %262, %cst_99 [1] : vector<8x128xf32> to vector<8xf32>
    %272 = vector.shape_cast %271 : vector<8xf32> to vector<8x1xf32>
    %273 = arith.mulf %262, %262 : vector<8x128xf32>
    %cst_100 = arith.constant dense<0.000000e+00> : vector<8xf32>
    %274 = vector.multi_reduction <add>, %273, %cst_100 [1] : vector<8x128xf32> to vector<8xf32>
    %275 = vector.shape_cast %274 : vector<8xf32> to vector<8x1xf32>
    %cst_101 = arith.constant 3.125000e-02 : f32
    %276 = vector.broadcast %cst_101 : f32 to vector<8x1xf32>
    %277 = arith.mulf %272, %276 : vector<8x1xf32>
    %cst_102 = arith.constant 3.125000e-02 : f32
    %278 = vector.broadcast %cst_102 : f32 to vector<8x1xf32>
    %279 = arith.mulf %275, %278 : vector<8x1xf32>
    %280 = arith.mulf %277, %277 : vector<8x1xf32>
    %281 = arith.subf %279, %280 : vector<8x1xf32>
    %282 = vector.broadcast %277 : vector<8x1xf32> to vector<8x128xf32>
    %283 = arith.subf %262, %282 : vector<8x128xf32>
    %cst_103 = arith.constant 9.99999974E-6 : f32
    %284 = vector.broadcast %cst_103 : f32 to vector<8x1xf32>
    %285 = arith.addf %281, %284 : vector<8x1xf32>
    %286 = math.rsqrt %285 : vector<8x1xf32>
    %287 = vector.broadcast %286 : vector<8x1xf32> to vector<8x128xf32>
    %288 = arith.mulf %283, %287 : vector<8x128xf32>
    %289 = vector.broadcast %263 : vector<1x128xf32> to vector<8x128xf32>
    %290 = arith.mulf %288, %289 : vector<8x128xf32>
    %291 = vector.broadcast %264 : vector<1x128xf32> to vector<8x128xf32>
    %292 = arith.addf %290, %291 : vector<8x128xf32>
    %293 = arith.negf %292 : vector<8x128xf32>
    %294 = math.exp %293 : vector<8x128xf32>
    %cst_104 = arith.constant 1.000000e+00 : f32
    %295 = vector.broadcast %cst_104 : f32 to vector<8x128xf32>
    %296 = arith.addf %295, %294 : vector<8x128xf32>
    %297 = arith.divf %295, %296 : vector<8x128xf32>
    %298 = arith.mulf %292, %297 : vector<8x128xf32>
    %cst_105 = arith.constant dense<0.000000e+00> : vector<8x128xf32>
    %299 = tpu.matmul %298, %269, %cst_105 {dimension_numbers = #tpu.dot_dimension_numbers<[1], [0], [0], [1], [0, 0, 1, 1], [], []>} : vector<8x128xf32>, vector<128x128xf32>, vector<8x128xf32> -> vector<8x128xf32>
    %300 = vector.broadcast %265 : vector<1x128xf32> to vector<8x128xf32>
    %301 = arith.addf %299, %300 : vector<8x128xf32>
    %302 = vector.extract_strided_slice %27 {offsets = [0, 384], sizes = [8, 128], strides = [1, 1]} : vector<8x640xf32> to vector<8x128xf32>
    %303 = arith.addf %301, %302 : vector<8x128xf32>
    %cst_106 = arith.constant dense<0.000000e+00> : vector<8xf32>
    %304 = vector.multi_reduction <add>, %303, %cst_106 [1] : vector<8x128xf32> to vector<8xf32>
    %305 = vector.shape_cast %304 : vector<8xf32> to vector<8x1xf32>
    %306 = arith.mulf %303, %303 : vector<8x128xf32>
    %cst_107 = arith.constant dense<0.000000e+00> : vector<8xf32>
    %307 = vector.multi_reduction <add>, %306, %cst_107 [1] : vector<8x128xf32> to vector<8xf32>
    %308 = vector.shape_cast %307 : vector<8xf32> to vector<8x1xf32>
    %cst_108 = arith.constant 3.125000e-02 : f32
    %309 = vector.broadcast %cst_108 : f32 to vector<8x1xf32>
    %310 = arith.mulf %305, %309 : vector<8x1xf32>
    %cst_109 = arith.constant 3.125000e-02 : f32
    %311 = vector.broadcast %cst_109 : f32 to vector<8x1xf32>
    %312 = arith.mulf %308, %311 : vector<8x1xf32>
    %313 = arith.mulf %310, %310 : vector<8x1xf32>
    %314 = arith.subf %312, %313 : vector<8x1xf32>
    %315 = vector.broadcast %310 : vector<8x1xf32> to vector<8x128xf32>
    %316 = arith.subf %303, %315 : vector<8x128xf32>
    %cst_110 = arith.constant 9.99999974E-6 : f32
    %317 = vector.broadcast %cst_110 : f32 to vector<8x1xf32>
    %318 = arith.addf %314, %317 : vector<8x1xf32>
    %319 = math.rsqrt %318 : vector<8x1xf32>
    %320 = vector.broadcast %319 : vector<8x1xf32> to vector<8x128xf32>
    %321 = arith.mulf %316, %320 : vector<8x128xf32>
    %322 = vector.broadcast %266 : vector<1x128xf32> to vector<8x128xf32>
    %323 = arith.mulf %321, %322 : vector<8x128xf32>
    %324 = vector.broadcast %267 : vector<1x128xf32> to vector<8x128xf32>
    %325 = arith.addf %323, %324 : vector<8x128xf32>
    %326 = arith.negf %325 : vector<8x128xf32>
    %327 = math.exp %326 : vector<8x128xf32>
    %cst_111 = arith.constant 1.000000e+00 : f32
    %328 = vector.broadcast %cst_111 : f32 to vector<8x128xf32>
    %329 = arith.addf %328, %327 : vector<8x128xf32>
    %330 = arith.divf %328, %329 : vector<8x128xf32>
    %331 = arith.mulf %325, %330 : vector<8x128xf32>
    %cst_112 = arith.constant dense<0.000000e+00> : vector<8x128xf32>
    %332 = tpu.matmul %331, %270, %cst_112 {dimension_numbers = #tpu.dot_dimension_numbers<[1], [0], [0], [1], [0, 0, 1, 1], [], []>} : vector<8x128xf32>, vector<128x128xf32>, vector<8x128xf32> -> vector<8x128xf32>
    %333 = vector.broadcast %268 : vector<1x128xf32> to vector<8x128xf32>
    %334 = arith.addf %332, %333 : vector<8x128xf32>
    %335 = arith.addf %262, %334 : vector<8x128xf32>
    %c1728 = arith.constant 1728 : index
    %c0_113 = arith.constant 0 : index
    %336 = vector.load %arg2[%c1728, %c0_113] : memref<2264x128xf32, #tpu.memory_space<vmem>>, vector<128x128xf32>
    %c1856 = arith.constant 1856 : index
    %c0_114 = arith.constant 0 : index
    %337 = vector.load %arg2[%c1856, %c0_114] : memref<2264x128xf32, #tpu.memory_space<vmem>>, vector<1x128xf32>
    %cst_115 = arith.constant dense<0.000000e+00> : vector<8x128xf32>
    %338 = tpu.matmul %335, %336, %cst_115 {dimension_numbers = #tpu.dot_dimension_numbers<[1], [0], [0], [1], [0, 0, 1, 1], [], []>} : vector<8x128xf32>, vector<128x128xf32>, vector<8x128xf32> -> vector<8x128xf32>
    %339 = vector.broadcast %337 : vector<1x128xf32> to vector<8x128xf32>
    %340 = arith.addf %338, %339 : vector<8x128xf32>
    %c2120 = arith.constant 2120 : index
    %c0_116 = arith.constant 0 : index
    %341 = vector.load %arg2[%c2120, %c0_116] : memref<2264x128xf32, #tpu.memory_space<vmem>>, vector<1x128xf32>
    %c2121 = arith.constant 2121 : index
    %c0_117 = arith.constant 0 : index
    %342 = vector.load %arg2[%c2121, %c0_117] : memref<2264x128xf32, #tpu.memory_space<vmem>>, vector<1x128xf32>
    %c2122 = arith.constant 2122 : index
    %c0_118 = arith.constant 0 : index
    %343 = vector.load %arg2[%c2122, %c0_118] : memref<2264x128xf32, #tpu.memory_space<vmem>>, vector<1x128xf32>
    %c2123 = arith.constant 2123 : index
    %c0_119 = arith.constant 0 : index
    %344 = vector.load %arg2[%c2123, %c0_119] : memref<2264x128xf32, #tpu.memory_space<vmem>>, vector<1x128xf32>
    %c2124 = arith.constant 2124 : index
    %c0_120 = arith.constant 0 : index
    %345 = vector.load %arg2[%c2124, %c0_120] : memref<2264x128xf32, #tpu.memory_space<vmem>>, vector<1x128xf32>
    %c2125 = arith.constant 2125 : index
    %c0_121 = arith.constant 0 : index
    %346 = vector.load %arg2[%c2125, %c0_121] : memref<2264x128xf32, #tpu.memory_space<vmem>>, vector<1x128xf32>
    %c1864 = arith.constant 1864 : index
    %c0_122 = arith.constant 0 : index
    %347 = vector.load %arg2[%c1864, %c0_122] : memref<2264x128xf32, #tpu.memory_space<vmem>>, vector<128x128xf32>
    %c1992 = arith.constant 1992 : index
    %c0_123 = arith.constant 0 : index
    %348 = vector.load %arg2[%c1992, %c0_123] : memref<2264x128xf32, #tpu.memory_space<vmem>>, vector<128x128xf32>
    %cst_124 = arith.constant dense<0.000000e+00> : vector<8xf32>
    %349 = vector.multi_reduction <add>, %340, %cst_124 [1] : vector<8x128xf32> to vector<8xf32>
    %350 = vector.shape_cast %349 : vector<8xf32> to vector<8x1xf32>
    %351 = arith.mulf %340, %340 : vector<8x128xf32>
    %cst_125 = arith.constant dense<0.000000e+00> : vector<8xf32>
    %352 = vector.multi_reduction <add>, %351, %cst_125 [1] : vector<8x128xf32> to vector<8xf32>
    %353 = vector.shape_cast %352 : vector<8xf32> to vector<8x1xf32>
    %cst_126 = arith.constant 1.562500e-02 : f32
    %354 = vector.broadcast %cst_126 : f32 to vector<8x1xf32>
    %355 = arith.mulf %350, %354 : vector<8x1xf32>
    %cst_127 = arith.constant 1.562500e-02 : f32
    %356 = vector.broadcast %cst_127 : f32 to vector<8x1xf32>
    %357 = arith.mulf %353, %356 : vector<8x1xf32>
    %358 = arith.mulf %355, %355 : vector<8x1xf32>
    %359 = arith.subf %357, %358 : vector<8x1xf32>
    %360 = vector.broadcast %355 : vector<8x1xf32> to vector<8x128xf32>
    %361 = arith.subf %340, %360 : vector<8x128xf32>
    %cst_128 = arith.constant 9.99999974E-6 : f32
    %362 = vector.broadcast %cst_128 : f32 to vector<8x1xf32>
    %363 = arith.addf %359, %362 : vector<8x1xf32>
    %364 = math.rsqrt %363 : vector<8x1xf32>
    %365 = vector.broadcast %364 : vector<8x1xf32> to vector<8x128xf32>
    %366 = arith.mulf %361, %365 : vector<8x128xf32>
    %367 = vector.broadcast %341 : vector<1x128xf32> to vector<8x128xf32>
    %368 = arith.mulf %366, %367 : vector<8x128xf32>
    %369 = vector.broadcast %342 : vector<1x128xf32> to vector<8x128xf32>
    %370 = arith.addf %368, %369 : vector<8x128xf32>
    %371 = arith.negf %370 : vector<8x128xf32>
    %372 = math.exp %371 : vector<8x128xf32>
    %cst_129 = arith.constant 1.000000e+00 : f32
    %373 = vector.broadcast %cst_129 : f32 to vector<8x128xf32>
    %374 = arith.addf %373, %372 : vector<8x128xf32>
    %375 = arith.divf %373, %374 : vector<8x128xf32>
    %376 = arith.mulf %370, %375 : vector<8x128xf32>
    %cst_130 = arith.constant dense<0.000000e+00> : vector<8x128xf32>
    %377 = tpu.matmul %376, %347, %cst_130 {dimension_numbers = #tpu.dot_dimension_numbers<[1], [0], [0], [1], [0, 0, 1, 1], [], []>} : vector<8x128xf32>, vector<128x128xf32>, vector<8x128xf32> -> vector<8x128xf32>
    %378 = vector.broadcast %343 : vector<1x128xf32> to vector<8x128xf32>
    %379 = arith.addf %377, %378 : vector<8x128xf32>
    %380 = vector.extract_strided_slice %27 {offsets = [0, 512], sizes = [8, 128], strides = [1, 1]} : vector<8x640xf32> to vector<8x128xf32>
    %381 = arith.addf %379, %380 : vector<8x128xf32>
    %cst_131 = arith.constant dense<0.000000e+00> : vector<8xf32>
    %382 = vector.multi_reduction <add>, %381, %cst_131 [1] : vector<8x128xf32> to vector<8xf32>
    %383 = vector.shape_cast %382 : vector<8xf32> to vector<8x1xf32>
    %384 = arith.mulf %381, %381 : vector<8x128xf32>
    %cst_132 = arith.constant dense<0.000000e+00> : vector<8xf32>
    %385 = vector.multi_reduction <add>, %384, %cst_132 [1] : vector<8x128xf32> to vector<8xf32>
    %386 = vector.shape_cast %385 : vector<8xf32> to vector<8x1xf32>
    %cst_133 = arith.constant 1.562500e-02 : f32
    %387 = vector.broadcast %cst_133 : f32 to vector<8x1xf32>
    %388 = arith.mulf %383, %387 : vector<8x1xf32>
    %cst_134 = arith.constant 1.562500e-02 : f32
    %389 = vector.broadcast %cst_134 : f32 to vector<8x1xf32>
    %390 = arith.mulf %386, %389 : vector<8x1xf32>
    %391 = arith.mulf %388, %388 : vector<8x1xf32>
    %392 = arith.subf %390, %391 : vector<8x1xf32>
    %393 = vector.broadcast %388 : vector<8x1xf32> to vector<8x128xf32>
    %394 = arith.subf %381, %393 : vector<8x128xf32>
    %cst_135 = arith.constant 9.99999974E-6 : f32
    %395 = vector.broadcast %cst_135 : f32 to vector<8x1xf32>
    %396 = arith.addf %392, %395 : vector<8x1xf32>
    %397 = math.rsqrt %396 : vector<8x1xf32>
    %398 = vector.broadcast %397 : vector<8x1xf32> to vector<8x128xf32>
    %399 = arith.mulf %394, %398 : vector<8x128xf32>
    %400 = vector.broadcast %344 : vector<1x128xf32> to vector<8x128xf32>
    %401 = arith.mulf %399, %400 : vector<8x128xf32>
    %402 = vector.broadcast %345 : vector<1x128xf32> to vector<8x128xf32>
    %403 = arith.addf %401, %402 : vector<8x128xf32>
    %404 = arith.negf %403 : vector<8x128xf32>
    %405 = math.exp %404 : vector<8x128xf32>
    %cst_136 = arith.constant 1.000000e+00 : f32
    %406 = vector.broadcast %cst_136 : f32 to vector<8x128xf32>
    %407 = arith.addf %406, %405 : vector<8x128xf32>
    %408 = arith.divf %406, %407 : vector<8x128xf32>
    %409 = arith.mulf %403, %408 : vector<8x128xf32>
    %cst_137 = arith.constant dense<0.000000e+00> : vector<8x128xf32>
    %410 = tpu.matmul %409, %348, %cst_137 {dimension_numbers = #tpu.dot_dimension_numbers<[1], [0], [0], [1], [0, 0, 1, 1], [], []>} : vector<8x128xf32>, vector<128x128xf32>, vector<8x128xf32> -> vector<8x128xf32>
    %411 = vector.broadcast %346 : vector<1x128xf32> to vector<8x128xf32>
    %412 = arith.addf %410, %411 : vector<8x128xf32>
    %413 = arith.addf %340, %412 : vector<8x128xf32>
    %c2128 = arith.constant 2128 : index
    %c0_138 = arith.constant 0 : index
    %414 = vector.load %arg2[%c2128, %c0_138] : memref<2264x128xf32, #tpu.memory_space<vmem>>, vector<128x128xf32>
    %c2256 = arith.constant 2256 : index
    %c0_139 = arith.constant 0 : index
    %415 = vector.load %arg2[%c2256, %c0_139] : memref<2264x128xf32, #tpu.memory_space<vmem>>, vector<1x128xf32>
    %cst_140 = arith.constant dense<0.000000e+00> : vector<8x128xf32>
    %416 = tpu.matmul %413, %414, %cst_140 {dimension_numbers = #tpu.dot_dimension_numbers<[1], [0], [0], [1], [0, 0, 1, 1], [], []>} : vector<8x128xf32>, vector<128x128xf32>, vector<8x128xf32> -> vector<8x128xf32>
    %417 = vector.broadcast %415 : vector<1x128xf32> to vector<8x128xf32>
    %418 = arith.addf %416, %417 : vector<8x128xf32>
    %c0_141 = arith.constant 0 : index
    %c0_142 = arith.constant 0 : index
    %419 = vector.load %arg4[%c0_141, %c0_142] : memref<8x128xf32, #tpu.memory_space<vmem>>, vector<8x128xf32>
    tpu.vector_store %arg4[%c0_141, %c0_142], %418 {strides = array<i32>} : memref<8x128xf32, #tpu.memory_space<vmem>>, vector<8x128xf32>,
    return
  }
}

</mosaic_0001>

<llo_original>
// kernel: diffcdr_forward.1
$region0: #{diffcdr_forward.1}
  #allocation0 [shape = 'u32[]', space=smem, size = 0x4, offset = 0x4, fixed_abs, tag = 'smem constant byte address 0x4 - core index']
  #allocation1 [shape = 'u32[72,128]{1,0:T(1,128)}', space=vmem, size = 0x9000, scoped, tag = 'internal scratch']
  %s0 = inlined_call_operand.vmem [shape: f32[8,128], index: 0, kind: input, shape index: {}]
  %s1 = inlined_call_operand.vmem [shape: f32[8,128], index: 1, kind: input, shape index: {}]
  %s2 = inlined_call_operand.hbm [shape: f32[2264,128], index: 2, kind: input, shape index: {}]
  %s3 = inlined_call_operand.hbm [shape: f32[136,640], index: 3, kind: input, shape index: {}]
  %s4 = inlined_call_operand.hbm [shape: f32[8,128], index: 4, kind: output, shape index: {}]
  %s5 = sld [smem:[#allocation0]]
  $region34: #{diffcdr_forward.1} parent=0
    _
  %s7 = ssub.s32 1, %s5
  %s8 = scalar_select 0, %s7, %s5
  $region1: #{diffcdr_forward.1} parent=0
    #allocation2 [shape = 'u8[1159168]{0}', space=vmem, size = 0x11b000, scoped, tag = 'input window, operand 2, single buffered']
    #allocation3 [shape = 's32[1]{0}', space=sflag, size = 0x4, scoped, tag = 'scoped memory for diffcdr_forward.1']
    #allocation4 [shape = 's32[1]{0}', space=sflag, size = 0x4, scoped, tag = 'scoped memory for diffcdr_forward.1']
    #allocation5 [shape = 'u8[348160]{0}', space=vmem, size = 0x55000, scoped, tag = 'input window, operand 3, single buffered']
    #allocation6 [shape = 's32[1]{0}', space=sflag, size = 0x4, scoped, tag = 'scoped memory for diffcdr_forward.1']
    #allocation7 [shape = 'u8[4096]{0}', space=vmem, size = 0x1000, scoped, tag = 'output window, operand 0, single buffered']
    %9 = vsyncpa [#allocation3], 0
    %10 = vsyncpa [#allocation6], 0
    %11 = vsyncpa [#allocation4], 0
    // Predicated region
    $region2: #{diffcdr_forward.1} parent=1 // pred_check
      _
    $region3: #{diffcdr_forward.1} parent=1 // pred_check_branch
      %13 = sbr.rel (0) target = $region5
    $region4: #{diffcdr_forward.1} parent=1 // pred_region
      _
    $region5: #{diffcdr_forward.1} parent=1 // pred_fallthru
      _
    // Predicated region
    $region6: #{diffcdr_forward.1} parent=1 // pred_check
      _
    $region7: #{diffcdr_forward.1} parent=1 // pred_check_branch
      %15 = sbr.rel (0) target = $region9
    $region8: #{diffcdr_forward.1} parent=1 // pred_region
      _
    $region9: #{diffcdr_forward.1} parent=1 // pred_fallthru
      _
    // Predicated region
    $region10: #{diffcdr_forward.1} parent=1 // pred_check
      _
    $region11: #{diffcdr_forward.1} parent=1 // pred_check_branch
      %17 = sbr.rel (0) target = $region13
    $region12: #{diffcdr_forward.1} parent=1 // pred_region
      %19 = vsyncadd [#allocation3], 0
      %s20 = sshll.u32 %s2, 4
      %s21 = int_to_ptr.hbm [resolvable:$true] %s20
      %s22 = sshll.u32 [#allocation2], 4
      %s23 = int_to_ptr.vmem [resolvable:$true] %s22
      %28 = dma.hbm_to_vmem [thread:$0]  %s21, 36224, %s23, [#allocation3], 128, 128, 8
    $region13: #{diffcdr_forward.1} parent=1 // pred_fallthru
      _
    // Predicated region
    $region14: #{diffcdr_forward.1} parent=1 // pred_check
      _
    $region15: #{diffcdr_forward.1} parent=1 // pred_check_branch
      %30 = sbr.rel (0) target = $region17
    $region16: #{diffcdr_forward.1} parent=1 // pred_region
      %32 = vsyncadd [#allocation6], 0
      %s33 = sshll.u32 %s3, 4
      %s34 = int_to_ptr.hbm [resolvable:$true] %s33
      %s35 = sshll.u32 [#allocation5], 4
      %s36 = int_to_ptr.vmem [resolvable:$true] %s35
      %41 = dma.hbm_to_vmem [thread:$0]  %s34, 10880, %s36, [#allocation6], 640, 640, 40
    $region17: #{diffcdr_forward.1} parent=1 // pred_fallthru
      _
    // Predicated region
    $region18: #{diffcdr_forward.1} parent=1 // pred_check
      _
    $region19: #{diffcdr_forward.1} parent=1 // pred_check_branch
      %43 = sbr.rel (0) target = $region21
    $region20: #{diffcdr_forward.1} parent=1 // pred_region
      %45 = dma.done [#allocation3], 36224
    $region21: #{diffcdr_forward.1} parent=1 // pred_fallthru
      _
    // Predicated region
    $region22: #{diffcdr_forward.1} parent=1 // pred_check
      _
    $region23: #{diffcdr_forward.1} parent=1 // pred_check_branch
      %47 = sbr.rel (0) target = $region25
    $region24: #{diffcdr_forward.1} parent=1 // pred_region
      %49 = dma.done [#allocation6], 10880
    $region25: #{diffcdr_forward.1} parent=1 // pred_fallthru
      _
    %v50 = vld [vmem:[#allocation2] sm:$0xff]
    %v51 = vld [vmem:[#allocation2 + $0x8] sm:$0xff]
    %v52 = vld [vmem:[#allocation2 + $0x10] sm:$0xff]
    %v53 = vld [vmem:[#allocation2 + $0x18] sm:$0xff]
    %v54 = vld [vmem:[#allocation2 + $0x20] sm:$0xff]
    %v55 = vld [vmem:[#allocation2 + $0x28] sm:$0xff]
    %v56 = vld [vmem:[#allocation2 + $0x30] sm:$0xff]
    %v57 = vld [vmem:[#allocation2 + $0x38] sm:$0xff]
    %v58 = vld [vmem:[#allocation2 + $0x40] sm:$0xff]
    %v59 = vld [vmem:[#allocation2 + $0x48] sm:$0xff]
    %v60 = vld [vmem:[#allocation2 + $0x50] sm:$0xff]
    %v61 = vld [vmem:[#allocation2 + $0x58] sm:$0xff]
    %v62 = vld [vmem:[#allocation2 + $0x60] sm:$0xff]
    %v63 = vld [vmem:[#allocation2 + $0x68] sm:$0xff]
    %v64 = vld [vmem:[#allocation2 + $0x70] sm:$0xff]
    %v65 = vld [vmem:[#allocation2 + $0x78] sm:$0xff]
    %v66 = vld [vmem:[#allocation2 + $0x80] sm:$0xff]
    %v67 = vld [vmem:[#allocation2 + $0x88] sm:$0xff]
    %v68 = vld [vmem:[#allocation2 + $0x90] sm:$0xff]
    %v69 = vld [vmem:[#allocation2 + $0x98] sm:$0xff]
    %v70 = vld [vmem:[#allocation2 + $0xa0] sm:$0xff]
    %v71 = vld [vmem:[#allocation2 + $0xa8] sm:$0xff]
    %v72 = vld [vmem:[#allocation2 + $0xb0] sm:$0xff]
    %v73 = vld [vmem:[#allocation2 + $0xb8] sm:$0xff]
    %v74 = vld [vmem:[#allocation2 + $0xc0] sm:$0xff]
    %v75 = vld [vmem:[#allocation2 + $0xc8] sm:$0xff]
    %v76 = vld [vmem:[#allocation2 + $0xd0] sm:$0xff]
    %v77 = vld [vmem:[#allocation2 + $0xd8] sm:$0xff]
    %v78 = vld [vmem:[#allocation2 + $0xe0] sm:$0xff]
    %v79 = vld [vmem:[#allocation2 + $0xe8] sm:$0xff]
    %v80 = vld [vmem:[#allocation2 + $0xf0] sm:$0xff]
    %v81 = vld [vmem:[#allocation2 + $0xf8] sm:$0xff]
    %v82 = vld [vmem:[#allocation2 + $0x100] sm:$0x1]
    %v83 = vld [vmem:[#allocation2 + $0x101] sm:$0x1]
    %v84 = vld [vmem:[%s1] sm:$0xff]
    %v85 = vperm.slane %v82, 0
    %86 = vmatpush.msra.mxu0 %v65
    %87 = vmatpush.msra.mxu0 %v64
    %88 = vmatpush.msra.mxu0 %v63
    %89 = vmatpush.msra.mxu0 %v62
    %90 = vmatpush.msra.mxu0 %v61
    %91 = vmatpush.msra.mxu0 %v60
    %92 = vmatpush.msra.mxu0 %v59
    %93 = vmatpush.msra.mxu0 %v58
    %94 = vmatpush.msra.mxu0 %v57
    %95 = vmatpush.msra.mxu0 %v56
    %96 = vmatpush.msra.mxu0 %v55
    %97 = vmatpush.msra.mxu0 %v54
    %98 = vmatpush.msra.mxu0 %v53
    %99 = vmatpush.msra.mxu0 %v52
    %100 = vmatpush.msra.mxu0 %v51
    %101 = vmatpush.msra.mxu0 %v50
    %102 = vmatmul.f32.gmra.mxu0 %v84
    %v103 = vpop.f32.mrf.mxu0
    %v104 = vadd.f32 %v85, %v103
    %105 = vdwg.mxu0
    %v106 = vxor.u32 %v104, 2147483648
    %v107 = vmul.f32 %v106, 1.442695
    %v108 = vpow.pop %v107
    %v109 = vadd.f32 %v108, 1.0
    %v110 = vrcp.pop %v109
    %v111 = vmul.f32 %v109, %v110
    %v112 = vsub.f32 1.0, %v111
    %v113 = vmul.f32 %v110, %v112
    %v114 = vadd.f32 %v110, %v113
    %vm115 = vweird.f32 %v109
    %vm116 = vweird.f32 %v110
    %vm117 = vmor %vm115, %vm116
    %v118 = vsel %vm117, %v110, %v114
    %v119 = vand.u32 2147483647, %v109
    %vm120 = vcmp.eq.f32.partialorder %v119, 8.507059e+37
    %v121 = vand.u32 %v109, 2147483648
    %v122 = vor.u32 1.1754944e-38, %v121
    %v123 = vsel %vm120, %v122, %v118
    %v124 = vmul.f32 1.0, %v123
    %v125 = vmul.f32 %v104, %v124
    %v126 = vperm.slane %v83, 0
    %127 = vmatpush.msra.mxu0 %v81
    %128 = vmatpush.msra.mxu0 %v80
    %129 = vmatpush.msra.mxu0 %v79
    %130 = vmatpush.msra.mxu0 %v78
    %131 = vmatpush.msra.mxu0 %v77
    %132 = vmatpush.msra.mxu0 %v76
    %133 = vmatpush.msra.mxu0 %v75
    %134 = vmatpush.msra.mxu0 %v74
    %135 = vmatpush.msra.mxu0 %v73
    %136 = vmatpush.msra.mxu0 %v72
    %137 = vmatpush.msra.mxu0 %v71
    %138 = vmatpush.msra.mxu0 %v70
    %139 = vmatpush.msra.mxu0 %v69
    %140 = vmatpush.msra.mxu0 %v68
    %141 = vmatpush.msra.mxu0 %v67
    %142 = vmatpush.msra.mxu0 %v66
    %143 = vmatmul.f32.gmra.mxu0 %v125
    %v144 = vpop.f32.mrf.mxu0
    %v145 = vadd.f32 %v126, %v144
    %146 = vdwg.mxu0
    %v147 = vxor.u32 %v145, 2147483648
    %v148 = vmul.f32 %v147, 1.442695
    %v149 = vpow.pop %v148
    %v150 = vadd.f32 %v149, 1.0
    %v151 = vrcp.pop %v150
    %v152 = vmul.f32 %v150, %v151
    %v153 = vsub.f32 1.0, %v152
    %v154 = vmul.f32 %v151, %v153
    %v155 = vadd.f32 %v151, %v154
    %vm156 = vweird.f32 %v150
    %vm157 = vweird.f32 %v151
    %vm158 = vmor %vm156, %vm157
    %v159 = vsel %vm158, %v151, %v155
    %v160 = vand.u32 2147483647, %v150
    %vm161 = vcmp.eq.f32.partialorder %v160, 8.507059e+37
    %v162 = vand.u32 %v150, 2147483648
    %v163 = vor.u32 1.1754944e-38, %v162
    %v164 = vsel %vm161, %v163, %v159
    %v165 = vmul.f32 1.0, %v164
    %v166 = vmul.f32 %v145, %v165
    %v167 = vld [vmem:[#allocation5] sm:$0xff]
    %v168 = vld [vmem:[#allocation5 + $0x8] sm:$0xff]
    %v169 = vld [vmem:[#allocation5 + $0x10] sm:$0xff]
    %v170 = vld [vmem:[#allocation5 + $0x18] sm:$0xff]
    %v171 = vld [vmem:[#allocation5 + $0x20] sm:$0xff]
    %v172 = vld [vmem:[#allocation5 + $0x28] sm:$0xff]
    %v173 = vld [vmem:[#allocation5 + $0x30] sm:$0xff]
    %v174 = vld [vmem:[#allocation5 + $0x38] sm:$0xff]
    %v175 = vld [vmem:[#allocation5 + $0x40] sm:$0xff]
    %v176 = vld [vmem:[#allocation5 + $0x48] sm:$0xff]
    %v177 = vld [vmem:[#allocation5 + $0x50] sm:$0xff]
    %v178 = vld [vmem:[#allocation5 + $0x58] sm:$0xff]
    %v179 = vld [vmem:[#allocation5 + $0x60] sm:$0xff]
    %v180 = vld [vmem:[#allocation5 + $0x68] sm:$0xff]
    %v181 = vld [vmem:[#allocation5 + $0x70] sm:$0xff]
    %v182 = vld [vmem:[#allocation5 + $0x78] sm:$0xff]
    %v183 = vld [vmem:[#allocation5 + $0x80] sm:$0xff]
    %v184 = vld [vmem:[#allocation5 + $0x88] sm:$0xff]
    %v185 = vld [vmem:[#allocation5 + $0x90] sm:$0xff]
    %v186 = vld [vmem:[#allocation5 + $0x98] sm:$0xff]
    %v187 = vld [vmem:[#allocation5 + $0xa0] sm:$0xff]
    %v188 = vld [vmem:[#allocation5 + $0xa8] sm:$0xff]
    %v189 = vld [vmem:[#allocation5 + $0xb0] sm:$0xff]
    %v190 = vld [vmem:[#allocation5 + $0xb8] sm:$0xff]
    %v191 = vld [vmem:[#allocation5 + $0xc0] sm:$0xff]
    %v192 = vld [vmem:[#allocation5 + $0xc8] sm:$0xff]
    %v193 = vld [vmem:[#allocation5 + $0xd0] sm:$0xff]
    %v194 = vld [vmem:[#allocation5 + $0xd8] sm:$0xff]
    %v195 = vld [vmem:[#allocation5 + $0xe0] sm:$0xff]
    %v196 = vld [vmem:[#allocation5 + $0xe8] sm:$0xff]
    %v197 = vld [vmem:[#allocation5 + $0xf0] sm:$0xff]
    %v198 = vld [vmem:[#allocation5 + $0xf8] sm:$0xff]
    %v199 = vld [vmem:[#allocation5 + $0x100] sm:$0xff]
    %v200 = vld [vmem:[#allocation5 + $0x108] sm:$0xff]
    %v201 = vld [vmem:[#allocation5 + $0x110] sm:$0xff]
    %v202 = vld [vmem:[#allocation5 + $0x118] sm:$0xff]
    %v203 = vld [vmem:[#allocation5 + $0x120] sm:$0xff]
    %v204 = vld [vmem:[#allocation5 + $0x128] sm:$0xff]
    %v205 = vld [vmem:[#allocation5 + $0x130] sm:$0xff]
    %v206 = vld [vmem:[#allocation5 + $0x138] sm:$0xff]
    %v207 = vld [vmem:[#allocation5 + $0x140] sm:$0xff]
    %v208 = vld [vmem:[#allocation5 + $0x148] sm:$0xff]
    %v209 = vld [vmem:[#allocation5 + $0x150] sm:$0xff]
    %v210 = vld [vmem:[#allocation5 + $0x158] sm:$0xff]
    %v211 = vld [vmem:[#allocation5 + $0x160] sm:$0xff]
    %v212 = vld [vmem:[#allocation5 + $0x168] sm:$0xff]
    %v213 = vld [vmem:[#allocation5 + $0x170] sm:$0xff]
    %v214 = vld [vmem:[#allocation5 + $0x178] sm:$0xff]
    %v215 = vld [vmem:[#allocation5 + $0x180] sm:$0xff]
    %v216 = vld [vmem:[#allocation5 + $0x188] sm:$0xff]
    %v217 = vld [vmem:[#allocation5 + $0x190] sm:$0xff]
    %v218 = vld [vmem:[#allocation5 + $0x198] sm:$0xff]
    %v219 = vld [vmem:[#allocation5 + $0x1a0] sm:$0xff]
    %v220 = vld [vmem:[#allocation5 + $0x1a8] sm:$0xff]
    %v221 = vld [vmem:[#allocation5 + $0x1b0] sm:$0xff]
    %v222 = vld [vmem:[#allocation5 + $0x1b8] sm:$0xff]
    %v223 = vld [vmem:[#allocation5 + $0x1c0] sm:$0xff]
    %v224 = vld [vmem:[#allocation5 + $0x1c8] sm:$0xff]
    %v225 = vld [vmem:[#allocation5 + $0x1d0] sm:$0xff]
    %v226 = vld [vmem:[#allocation5 + $0x1d8] sm:$0xff]
    %v227 = vld [vmem:[#allocation5 + $0x1e0] sm:$0xff]
    %v228 = vld [vmem:[#allocation5 + $0x1e8] sm:$0xff]
    %v229 = vld [vmem:[#allocation5 + $0x1f0] sm:$0xff]
    %v230 = vld [vmem:[#allocation5 + $0x1f8] sm:$0xff]
    %v231 = vld [vmem:[#allocation5 + $0x200] sm:$0xff]
    %v232 = vld [vmem:[#allocation5 + $0x208] sm:$0xff]
    %v233 = vld [vmem:[#allocation5 + $0x210] sm:$0xff]
    %v234 = vld [vmem:[#allocation5 + $0x218] sm:$0xff]
    %v235 = vld [vmem:[#allocation5 + $0x220] sm:$0xff]
    %v236 = vld [vmem:[#allocation5 + $0x228] sm:$0xff]
    %v237 = vld [vmem:[#allocation5 + $0x230] sm:$0xff]
    %v238 = vld [vmem:[#allocation5 + $0x238] sm:$0xff]
    %v239 = vld [vmem:[#allocation5 + $0x240] sm:$0xff]
    %v240 = vld [vmem:[#allocation5 + $0x248] sm:$0xff]
    %v241 = vld [vmem:[#allocation5 + $0x250] sm:$0xff]
    %v242 = vld [vmem:[#allocation5 + $0x258] sm:$0xff]
    %v243 = vld [vmem:[#allocation5 + $0x260] sm:$0xff]
    %v244 = vld [vmem:[#allocation5 + $0x268] sm:$0xff]
    %v245 = vld [vmem:[#allocation5 + $0x270] sm:$0xff]
    %v246 = vld [vmem:[#allocation5 + $0x278] sm:$0xff]
    %s247 = scalar_lea.vmem [#allocation5], 640
    %v248 = vld [vmem:[%s247] ss:$8 sm:$0xf]
    %v249 = vld [vmem:[%s247] ss:$8 sm:$0x10]
    %v250 = vor.u32 %v248, %v249
    %v252 = vperm.slane %v250, 0
    %v253 = vperm.slane %v250, 1
    %v254 = vperm.slane %v250, 2
    %v255 = vperm.slane %v250, 3
    %v256 = vperm.slane %v250, 4
    %262 = vmatpush.msra.mxu0 %v242
    %263 = vmatpush.msra.mxu0 %v237
    %264 = vmatpush.msra.mxu0 %v232
    %265 = vmatpush.msra.mxu0 %v227
    %266 = vmatpush.msra.mxu0 %v222
    %267 = vmatpush.msra.mxu0 %v217
    %268 = vmatpush.msra.mxu0 %v212
    %269 = vmatpush.msra.mxu0 %v207
    %270 = vmatpush.msra.mxu0 %v202
    %271 = vmatpush.msra.mxu0 %v197
    %272 = vmatpush.msra.mxu0 %v192
    %273 = vmatpush.msra.mxu0 %v187
    %274 = vmatpush.msra.mxu0 %v182
    %275 = vmatpush.msra.mxu0 %v177
    %276 = vmatpush.msra.mxu0 %v172
    %277 = vmatpush.msra.mxu0 %v167
    %278 = vmatmul.f32.gmra.mxu0 %v166
    %v279 = vpop.f32.mrf.mxu0
    %v280 = vadd.f32 %v252, %v279
    %281 = vdwg.mxu0
    %282 = vmatpush.msra.mxu0 %v243
    %283 = vmatpush.msra.mxu0 %v238
    %284 = vmatpush.msra.mxu0 %v233
    %285 = vmatpush.msra.mxu0 %v228
    %286 = vmatpush.msra.mxu0 %v223
    %287 = vmatpush.msra.mxu0 %v218
    %288 = vmatpush.msra.mxu0 %v213
    %289 = vmatpush.msra.mxu0 %v208
    %290 = vmatpush.msra.mxu0 %v203
    %291 = vmatpush.msra.mxu0 %v198
    %292 = vmatpush.msra.mxu0 %v193
    %293 = vmatpush.msra.mxu0 %v188
    %294 = vmatpush.msra.mxu0 %v183
    %295 = vmatpush.msra.mxu0 %v178
    %296 = vmatpush.msra.mxu0 %v173
    %297 = vmatpush.msra.mxu0 %v168
    %298 = vmatmul.f32.gmra.mxu0 %v166
    %v299 = vpop.f32.mrf.mxu0
    %v300 = vadd.f32 %v253, %v299
    %301 = vdwg.mxu0
    %302 = vmatpush.msra.mxu0 %v244
    %303 = vmatpush.msra.mxu0 %v239
    %304 = vmatpush.msra.mxu0 %v234
    %305 = vmatpush.msra.mxu0 %v229
    %306 = vmatpush.msra.mxu0 %v224
    %307 = vmatpush.msra.mxu0 %v219
    %308 = vmatpush.msra.mxu0 %v214
    %309 = vmatpush.msra.mxu0 %v209
    %310 = vmatpush.msra.mxu0 %v204
    %311 = vmatpush.msra.mxu0 %v199
    %312 = vmatpush.msra.mxu0 %v194
    %313 = vmatpush.msra.mxu0 %v189
    %314 = vmatpush.msra.mxu0 %v184
    %315 = vmatpush.msra.mxu0 %v179
    %316 = vmatpush.msra.mxu0 %v174
    %317 = vmatpush.msra.mxu0 %v169
    %318 = vmatmul.f32.gmra.mxu0 %v166
    %v319 = vpop.f32.mrf.mxu0
    %v320 = vadd.f32 %v254, %v319
    %321 = vdwg.mxu0
    %322 = vmatpush.msra.mxu0 %v245
    %323 = vmatpush.msra.mxu0 %v240
    %324 = vmatpush.msra.mxu0 %v235
    %325 = vmatpush.msra.mxu0 %v230
    %326 = vmatpush.msra.mxu0 %v225
    %327 = vmatpush.msra.mxu0 %v220
    %328 = vmatpush.msra.mxu0 %v215
    %329 = vmatpush.msra.mxu0 %v210
    %330 = vmatpush.msra.mxu0 %v205
    %331 = vmatpush.msra.mxu0 %v200
    %332 = vmatpush.msra.mxu0 %v195
    %333 = vmatpush.msra.mxu0 %v190
    %334 = vmatpush.msra.mxu0 %v185
    %335 = vmatpush.msra.mxu0 %v180
    %336 = vmatpush.msra.mxu0 %v175
    %337 = vmatpush.msra.mxu0 %v170
    %338 = vmatmul.f32.gmra.mxu0 %v166
    %v339 = vpop.f32.mrf.mxu0
    %v340 = vadd.f32 %v255, %v339
    %341 = vdwg.mxu0
    %342 = vmatpush.msra.mxu0 %v246
    %343 = vmatpush.msra.mxu0 %v241
    %344 = vmatpush.msra.mxu0 %v236
    %345 = vmatpush.msra.mxu0 %v231
    %346 = vmatpush.msra.mxu0 %v226
    %347 = vmatpush.msra.mxu0 %v221
    %348 = vmatpush.msra.mxu0 %v216
    %349 = vmatpush.msra.mxu0 %v211
    %350 = vmatpush.msra.mxu0 %v206
    %351 = vmatpush.msra.mxu0 %v201
    %352 = vmatpush.msra.mxu0 %v196
    %353 = vmatpush.msra.mxu0 %v191
    %354 = vmatpush.msra.mxu0 %v186
    %355 = vmatpush.msra.mxu0 %v181
    %356 = vmatpush.msra.mxu0 %v176
    %357 = vmatpush.msra.mxu0 %v171
    %358 = vmatmul.f32.gmra.mxu0 %v166
    %v359 = vpop.f32.mrf.mxu0
    %v360 = vadd.f32 %v256, %v359
    %361 = vdwg.mxu0
    %v362 = vld [vmem:[%s0] sm:$0xff]
    %v363 = vld [vmem:[#allocation2 + $0x108] sm:$0xff]
    %v364 = vld [vmem:[#allocation2 + $0x110] sm:$0xff]
    %v365 = vld [vmem:[#allocation2 + $0x118] sm:$0xff]
    %v366 = vld [vmem:[#allocation2 + $0x120] sm:$0xff]
    %v367 = vld [vmem:[#allocation2 + $0x128] sm:$0xff]
    %v368 = vld [vmem:[#allocation2 + $0x130] sm:$0xff]
    %v369 = vld [vmem:[#allocation2 + $0x138] sm:$0xff]
    %v370 = vld [vmem:[#allocation2 + $0x140] sm:$0xff]
    %v371 = vld [vmem:[#allocation2 + $0x148] sm:$0xff]
    %v372 = vld [vmem:[#allocation2 + $0x150] sm:$0xff]
    %v373 = vld [vmem:[#allocation2 + $0x158] sm:$0xff]
    %v374 = vld [vmem:[#allocation2 + $0x160] sm:$0xff]
    %v375 = vld [vmem:[#allocation2 + $0x168] sm:$0xff]
    %v376 = vld [vmem:[#allocation2 + $0x170] sm:$0xff]
    %v377 = vld [vmem:[#allocation2 + $0x178] sm:$0xff]
    %v378 = vld [vmem:[#allocation2 + $0x180] sm:$0xff]
    %v379 = vld [vmem:[#allocation2 + $0x188] sm:$0x1]
    %v380 = vperm.slane %v379, 0
    %381 = vmatpush.msra.mxu0 %v378
    %382 = vmatpush.msra.mxu0 %v377
    %383 = vmatpush.msra.mxu0 %v376
    %384 = vmatpush.msra.mxu0 %v375
    %385 = vmatpush.msra.mxu0 %v374
    %386 = vmatpush.msra.mxu0 %v373
    %387 = vmatpush.msra.mxu0 %v372
    %388 = vmatpush.msra.mxu0 %v371
    %389 = vmatpush.msra.mxu0 %v370
    %390 = vmatpush.msra.mxu0 %v369
    %391 = vmatpush.msra.mxu0 %v368
    %392 = vmatpush.msra.mxu0 %v367
    %393 = vmatpush.msra.mxu0 %v366
    %394 = vmatpush.msra.mxu0 %v365
    %395 = vmatpush.msra.mxu0 %v364
    %396 = vmatpush.msra.mxu0 %v363
    %397 = vmatmul.f32.gmra.mxu0 %v362
    %v398 = vpop.f32.mrf.mxu0
    %v399 = vadd.f32 %v380, %v398
    %400 = vdwg.mxu0
    %v401 = vld [vmem:[#allocation2 + $0x290] sm:$0x1]
    %v402 = vld [vmem:[#allocation2 + $0x291] sm:$0x1]
    %v403 = vld [vmem:[#allocation2 + $0x292] sm:$0x1]
    %v404 = vld [vmem:[#allocation2 + $0x293] sm:$0x1]
    %v405 = vld [vmem:[#allocation2 + $0x294] sm:$0x1]
    %v406 = vld [vmem:[#allocation2 + $0x295] sm:$0x1]
    %v407 = vld [vmem:[#allocation2 + $0x190] sm:$0xff]
    %v408 = vld [vmem:[#allocation2 + $0x198] sm:$0xff]
    %v409 = vld [vmem:[#allocation2 + $0x1a0] sm:$0xff]
    %v410 = vld [vmem:[#allocation2 + $0x1a8] sm:$0xff]
    %v411 = vld [vmem:[#allocation2 + $0x1b0] sm:$0xff]
    %v412 = vld [vmem:[#allocation2 + $0x1b8] sm:$0xff]
    %v413 = vld [vmem:[#allocation2 + $0x1c0] sm:$0xff]
    %v414 = vld [vmem:[#allocation2 + $0x1c8] sm:$0xff]
    %v415 = vld [vmem:[#allocation2 + $0x1d0] sm:$0xff]
    %v416 = vld [vmem:[#allocation2 + $0x1d8] sm:$0xff]
    %v417 = vld [vmem:[#allocation2 + $0x1e0] sm:$0xff]
    %v418 = vld [vmem:[#allocation2 + $0x1e8] sm:$0xff]
    %v419 = vld [vmem:[#allocation2 + $0x1f0] sm:$0xff]
    %v420 = vld [vmem:[#allocation2 + $0x1f8] sm:$0xff]
    %v421 = vld [vmem:[#allocation2 + $0x200] sm:$0xff]
    %v422 = vld [vmem:[#allocation2 + $0x208] sm:$0xff]
    %v423 = vld [vmem:[#allocation2 + $0x210] sm:$0xff]
    %v424 = vld [vmem:[#allocation2 + $0x218] sm:$0xff]
    %v425 = vld [vmem:[#allocation2 + $0x220] sm:$0xff]
    %v426 = vld [vmem:[#allocation2 + $0x228] sm:$0xff]
    %v427 = vld [vmem:[#allocation2 + $0x230] sm:$0xff]
    %v428 = vld [vmem:[#allocation2 + $0x238] sm:$0xff]
    %v429 = vld [vmem:[#allocation2 + $0x240] sm:$0xff]
    %v430 = vld [vmem:[#allocation2 + $0x248] sm:$0xff]
    %v431 = vld [vmem:[#allocation2 + $0x250] sm:$0xff]
    %v432 = vld [vmem:[#allocation2 + $0x258] sm:$0xff]
    %v433 = vld [vmem:[#allocation2 + $0x260] sm:$0xff]
    %v434 = vld [vmem:[#allocation2 + $0x268] sm:$0xff]
    %v435 = vld [vmem:[#allocation2 + $0x270] sm:$0xff]
    %v436 = vld [vmem:[#allocation2 + $0x278] sm:$0xff]
    %v437 = vld [vmem:[#allocation2 + $0x280] sm:$0xff]
    %v438 = vld [vmem:[#allocation2 + $0x288] sm:$0xff]
    %439 = vadd.xlane.f32.xlu0 %v399
    %v440 = vpop.xlane.xlu0 %439
    %v441 = vmul.f32 %v399, %v399
    %442 = vadd.xlane.f32.xlu0 %v441
    %v443 = vpop.xlane.xlu0 %442
    %v444 = vmul.f32 %v440, 0.015625
    %v445 = vmul.f32 %v443, 0.015625
    %v446 = vmul.f32 %v444, %v444
    %v447 = vsub.f32 %v445, %v446
    %v448 = vsub.f32 %v399, %v444
    %v449 = vadd.f32 %v447, 1e-05
    %v450 = vrsqrt.pop %v449
    %v451 = vmul.f32 %v450, %v449
    %v452 = vmul.f32 %v451, %v450
    %v453 = vmul.f32 0.5, %v452
    %v454 = vsub.f32 1.5, %v453
    %v455 = vmul.f32 %v450, %v454
    %vm456 = vweird.f32 %v449
    %vm457 = vweird.f32 %v450
    %vm458 = vmor %vm456, %vm457
    %v459 = vsel %vm458, %v450, %v455
    %v460 = vmul.f32 %v448, %v459
    %v461 = vperm.slane %v401, 0
    %v462 = vmul.f32 %v460, %v461
    %v463 = vperm.slane %v402, 0
    %v464 = vadd.f32 %v462, %v463
    %v465 = vxor.u32 %v464, 2147483648
    %v466 = vmul.f32 %v465, 1.442695
    %v467 = vpow.pop %v466
    %v468 = vadd.f32 %v467, 1.0
    %v469 = vrcp.pop %v468
    %v470 = vmul.f32 %v468, %v469
    %v471 = vsub.f32 1.0, %v470
    %v472 = vmul.f32 %v469, %v471
    %v473 = vadd.f32 %v469, %v472
    %vm474 = vweird.f32 %v468
    %vm475 = vweird.f32 %v469
    %vm476 = vmor %vm474, %vm475
    %v477 = vsel %vm476, %v469, %v473
    %v478 = vand.u32 2147483647, %v468
    %vm479 = vcmp.eq.f32.partialorder %v478, 8.507059e+37
    %v480 = vand.u32 %v468, 2147483648
    %v481 = vor.u32 1.1754944e-38, %v480
    %v482 = vsel %vm479, %v481, %v477
    %v483 = vmul.f32 1.0, %v482
    %v484 = vmul.f32 %v464, %v483
    %v485 = vperm.slane %v403, 0
    %486 = vmatpush.msra.mxu0 %v422
    %487 = vmatpush.msra.mxu0 %v421
    %488 = vmatpush.msra.mxu0 %v420
    %489 = vmatpush.msra.mxu0 %v419
    %490 = vmatpush.msra.mxu0 %v418
    %491 = vmatpush.msra.mxu0 %v417
    %492 = vmatpush.msra.mxu0 %v416
    %493 = vmatpush.msra.mxu0 %v415
    %494 = vmatpush.msra.mxu0 %v414
    %495 = vmatpush.msra.mxu0 %v413
    %496 = vmatpush.msra.mxu0 %v412
    %497 = vmatpush.msra.mxu0 %v411
    %498 = vmatpush.msra.mxu0 %v410
    %499 = vmatpush.msra.mxu0 %v409
    %500 = vmatpush.msra.mxu0 %v408
    %501 = vmatpush.msra.mxu0 %v407
    %502 = vmatmul.f32.gmra.mxu0 %v484
    %v503 = vpop.f32.mrf.mxu0
    %v504 = vadd.f32 %v485, %v503
    %505 = vdwg.mxu0
    %v506 = vadd.f32 %v504, %v280
    %507 = vadd.xlane.f32.xlu0 %v506
    %v508 = vpop.xlane.xlu0 %507
    %v509 = vmul.f32 %v506, %v506
    %510 = vadd.xlane.f32.xlu0 %v509
    %v511 = vpop.xlane.xlu0 %510
    %v512 = vmul.f32 %v508, 0.015625
    %v513 = vmul.f32 %v511, 0.015625
    %v514 = vmul.f32 %v512, %v512
    %v515 = vsub.f32 %v513, %v514
    %v516 = vsub.f32 %v506, %v512
    %v517 = vadd.f32 %v515, 1e-05
    %v518 = vrsqrt.pop %v517
    %v519 = vmul.f32 %v518, %v517
    %v520 = vmul.f32 %v519, %v518
    %v521 = vmul.f32 0.5, %v520
    %v522 = vsub.f32 1.5, %v521
    %v523 = vmul.f32 %v518, %v522
    %vm524 = vweird.f32 %v517
    %vm525 = vweird.f32 %v518
    %vm526 = vmor %vm524, %vm525
    %v527 = vsel %vm526, %v518, %v523
    %v528 = vmul.f32 %v516, %v527
    %v529 = vperm.slane %v404, 0
    %v530 = vmul.f32 %v528, %v529
    %v531 = vperm.slane %v405, 0
    %v532 = vadd.f32 %v530, %v531
    %v533 = vxor.u32 %v532, 2147483648
    %v534 = vmul.f32 %v533, 1.442695
    %v535 = vpow.pop %v534
    %v536 = vadd.f32 %v535, 1.0
    %v537 = vrcp.pop %v536
    %v538 = vmul.f32 %v536, %v537
    %v539 = vsub.f32 1.0, %v538
    %v540 = vmul.f32 %v537, %v539
    %v541 = vadd.f32 %v537, %v540
    %vm542 = vweird.f32 %v536
    %vm543 = vweird.f32 %v537
    %vm544 = vmor %vm542, %vm543
    %v545 = vsel %vm544, %v537, %v541
    %v546 = vand.u32 2147483647, %v536
    %vm547 = vcmp.eq.f32.partialorder %v546, 8.507059e+37
    %v548 = vand.u32 %v536, 2147483648
    %v549 = vor.u32 1.1754944e-38, %v548
    %v550 = vsel %vm547, %v549, %v545
    %v551 = vmul.f32 1.0, %v550
    %v552 = vmul.f32 %v532, %v551
    %v553 = vperm.slane %v406, 0
    %554 = vmatpush.msra.mxu0 %v438
    %555 = vmatpush.msra.mxu0 %v437
    %556 = vmatpush.msra.mxu0 %v436
    %557 = vmatpush.msra.mxu0 %v435
    %558 = vmatpush.msra.mxu0 %v434
    %559 = vmatpush.msra.mxu0 %v433
    %560 = vmatpush.msra.mxu0 %v432
    %561 = vmatpush.msra.mxu0 %v431
    %562 = vmatpush.msra.mxu0 %v430
    %563 = vmatpush.msra.mxu0 %v429
    %564 = vmatpush.msra.mxu0 %v428
    %565 = vmatpush.msra.mxu0 %v427
    %566 = vmatpush.msra.mxu0 %v426
    %567 = vmatpush.msra.mxu0 %v425
    %568 = vmatpush.msra.mxu0 %v424
    %569 = vmatpush.msra.mxu0 %v423
    %570 = vmatmul.f32.gmra.mxu0 %v552
    %v571 = vpop.f32.mrf.mxu0
    %v572 = vadd.f32 %v553, %v571
    %573 = vdwg.mxu0
    %v574 = vadd.f32 %v399, %v572
    %v575 = vld [vmem:[#allocation2 + $0x298] sm:$0xff]
    %v576 = vld [vmem:[#allocation2 + $0x2a0] sm:$0xff]
    %v577 = vld [vmem:[#allocation2 + $0x2a8] sm:$0xff]
    %v578 = vld [vmem:[#allocation2 + $0x2b0] sm:$0xff]
    %v579 = vld [vmem:[#allocation2 + $0x2b8] sm:$0xff]
    %v580 = vld [vmem:[#allocation2 + $0x2c0] sm:$0xff]
    %v581 = vld [vmem:[#allocation2 + $0x2c8] sm:$0xff]
    %v582 = vld [vmem:[#allocation2 + $0x2d0] sm:$0xff]
    %v583 = vld [vmem:[#allocation2 + $0x2d8] sm:$0xff]
    %v584 = vld [vmem:[#allocation2 + $0x2e0] sm:$0xff]
    %v585 = vld [vmem:[#allocation2 + $0x2e8] sm:$0xff]
    %v586 = vld [vmem:[#allocation2 + $0x2f0] sm:$0xff]
    %v587 = vld [vmem:[#allocation2 + $0x2f8] sm:$0xff]
    %v588 = vld [vmem:[#allocation2 + $0x300] sm:$0xff]
    %v589 = vld [vmem:[#allocation2 + $0x308] sm:$0xff]
    %v590 = vld [vmem:[#allocation2 + $0x310] sm:$0xff]
    %v591 = vld [vmem:[#allocation2 + $0x318] sm:$0x1]
    %v592 = vperm.slane %v591, 0
    %593 = vmatpush.msra.mxu0 %v590
    %594 = vmatpush.msra.mxu0 %v589
    %595 = vmatpush.msra.mxu0 %v588
    %596 = vmatpush.msra.mxu0 %v587
    %597 = vmatpush.msra.mxu0 %v586
    %598 = vmatpush.msra.mxu0 %v585
    %599 = vmatpush.msra.mxu0 %v584
    %600 = vmatpush.msra.mxu0 %v583
    %601 = vmatpush.msra.mxu0 %v582
    %602 = vmatpush.msra.mxu0 %v581
    %603 = vmatpush.msra.mxu0 %v580
    %604 = vmatpush.msra.mxu0 %v579
    %605 = vmatpush.msra.mxu0 %v578
    %606 = vmatpush.msra.mxu0 %v577
    %607 = vmatpush.msra.mxu0 %v576
    %608 = vmatpush.msra.mxu0 %v575
    %609 = vmatmul.f32.gmra.mxu0 %v574
    %v610 = vpop.f32.mrf.mxu0
    %v611 = vadd.f32 %v592, %v610
    %612 = vdwg.mxu0
    %v613 = vld [vmem:[#allocation2 + $0x420] sm:$0x1]
    %v614 = vld [vmem:[#allocation2 + $0x421] sm:$0x1]
    %v615 = vld [vmem:[#allocation2 + $0x422] sm:$0x1]
    %v616 = vld [vmem:[#allocation2 + $0x423] sm:$0x1]
    %v617 = vld [vmem:[#allocation2 + $0x424] sm:$0x1]
    %v618 = vld [vmem:[#allocation2 + $0x425] sm:$0x1]
    %v619 = vld [vmem:[#allocation2 + $0x320] sm:$0xff]
    %v620 = vld [vmem:[#allocation2 + $0x328] sm:$0xff]
    %v621 = vld [vmem:[#allocation2 + $0x330] sm:$0xff]
    %v622 = vld [vmem:[#allocation2 + $0x338] sm:$0xff]
    %v623 = vld [vmem:[#allocation2 + $0x340] sm:$0xff]
    %v624 = vld [vmem:[#allocation2 + $0x348] sm:$0xff]
    %v625 = vld [vmem:[#allocation2 + $0x350] sm:$0xff]
    %v626 = vld [vmem:[#allocation2 + $0x358] sm:$0xff]
    %v627 = vld [vmem:[#allocation2 + $0x360] sm:$0xff]
    %v628 = vld [vmem:[#allocation2 + $0x368] sm:$0xff]
    %v629 = vld [vmem:[#allocation2 + $0x370] sm:$0xff]
    %v630 = vld [vmem:[#allocation2 + $0x378] sm:$0xff]
    %v631 = vld [vmem:[#allocation2 + $0x380] sm:$0xff]
    %v632 = vld [vmem:[#allocation2 + $0x388] sm:$0xff]
    %v633 = vld [vmem:[#allocation2 + $0x390] sm:$0xff]
    %v634 = vld [vmem:[#allocation2 + $0x398] sm:$0xff]
    %v635 = vld [vmem:[#allocation2 + $0x3a0] sm:$0xff]
    %v636 = vld [vmem:[#allocation2 + $0x3a8] sm:$0xff]
    %v637 = vld [vmem:[#allocation2 + $0x3b0] sm:$0xff]
    %v638 = vld [vmem:[#allocation2 + $0x3b8] sm:$0xff]
    %v639 = vld [vmem:[#allocation2 + $0x3c0] sm:$0xff]
    %v640 = vld [vmem:[#allocation2 + $0x3c8] sm:$0xff]
    %v641 = vld [vmem:[#allocation2 + $0x3d0] sm:$0xff]
    %v642 = vld [vmem:[#allocation2 + $0x3d8] sm:$0xff]
    %v643 = vld [vmem:[#allocation2 + $0x3e0] sm:$0xff]
    %v644 = vld [vmem:[#allocation2 + $0x3e8] sm:$0xff]
    %v645 = vld [vmem:[#allocation2 + $0x3f0] sm:$0xff]
    %v646 = vld [vmem:[#allocation2 + $0x3f8] sm:$0xff]
    %v647 = vld [vmem:[#allocation2 + $0x400] sm:$0xff]
    %v648 = vld [vmem:[#allocation2 + $0x408] sm:$0xff]
    %v649 = vld [vmem:[#allocation2 + $0x410] sm:$0xff]
    %v650 = vld [vmem:[#allocation2 + $0x418] sm:$0xff]
    %651 = vadd.xlane.f32.xlu0 %v611
    %v652 = vpop.xlane.xlu0 %651
    %v653 = vmul.f32 %v611, %v611
    %654 = vadd.xlane.f32.xlu0 %v653
    %v655 = vpop.xlane.xlu0 %654
    %v656 = vmul.f32 %v652, 0.03125
    %v657 = vmul.f32 %v655, 0.03125
    %v658 = vmul.f32 %v656, %v656
    %v659 = vsub.f32 %v657, %v658
    %v660 = vsub.f32 %v611, %v656
    %v661 = vadd.f32 %v659, 1e-05
    %v662 = vrsqrt.pop %v661
    %v663 = vmul.f32 %v662, %v661
    %v664 = vmul.f32 %v663, %v662
    %v665 = vmul.f32 0.5, %v664
    %v666 = vsub.f32 1.5, %v665
    %v667 = vmul.f32 %v662, %v666
    %vm668 = vweird.f32 %v661
    %vm669 = vweird.f32 %v662
    %vm670 = vmor %vm668, %vm669
    %v671 = vsel %vm670, %v662, %v667
    %v672 = vmul.f32 %v660, %v671
    %v673 = vperm.slane %v613, 0
    %v674 = vmul.f32 %v672, %v673
    %v675 = vperm.slane %v614, 0
    %v676 = vadd.f32 %v674, %v675
    %v677 = vxor.u32 %v676, 2147483648
    %v678 = vmul.f32 %v677, 1.442695
    %v679 = vpow.pop %v678
    %v680 = vadd.f32 %v679, 1.0
    %v681 = vrcp.pop %v680
    %v682 = vmul.f32 %v680, %v681
    %v683 = vsub.f32 1.0, %v682
    %v684 = vmul.f32 %v681, %v683
    %v685 = vadd.f32 %v681, %v684
    %vm686 = vweird.f32 %v680
    %vm687 = vweird.f32 %v681
    %vm688 = vmor %vm686, %vm687
    %v689 = vsel %vm688, %v681, %v685
    %v690 = vand.u32 2147483647, %v680
    %vm691 = vcmp.eq.f32.partialorder %v690, 8.507059e+37
    %v692 = vand.u32 %v680, 2147483648
    %v693 = vor.u32 1.1754944e-38, %v692
    %v694 = vsel %vm691, %v693, %v689
    %v695 = vmul.f32 1.0, %v694
    %v696 = vmul.f32 %v676, %v695
    %v697 = vperm.slane %v615, 0
    %698 = vmatpush.msra.mxu0 %v634
    %699 = vmatpush.msra.mxu0 %v633
    %700 = vmatpush.msra.mxu0 %v632
    %701 = vmatpush.msra.mxu0 %v631
    %702 = vmatpush.msra.mxu0 %v630
    %703 = vmatpush.msra.mxu0 %v629
    %704 = vmatpush.msra.mxu0 %v628
    %705 = vmatpush.msra.mxu0 %v627
    %706 = vmatpush.msra.mxu0 %v626
    %707 = vmatpush.msra.mxu0 %v625
    %708 = vmatpush.msra.mxu0 %v624
    %709 = vmatpush.msra.mxu0 %v623
    %710 = vmatpush.msra.mxu0 %v622
    %711 = vmatpush.msra.mxu0 %v621
    %712 = vmatpush.msra.mxu0 %v620
    %713 = vmatpush.msra.mxu0 %v619
    %714 = vmatmul.f32.gmra.mxu0 %v696
    %v715 = vpop.f32.mrf.mxu0
    %v716 = vadd.f32 %v697, %v715
    %717 = vdwg.mxu0
    %v718 = vadd.f32 %v716, %v300
    %719 = vadd.xlane.f32.xlu0 %v718
    %v720 = vpop.xlane.xlu0 %719
    %v721 = vmul.f32 %v718, %v718
    %722 = vadd.xlane.f32.xlu0 %v721
    %v723 = vpop.xlane.xlu0 %722
    %v724 = vmul.f32 %v720, 0.03125
    %v725 = vmul.f32 %v723, 0.03125
    %v726 = vmul.f32 %v724, %v724
    %v727 = vsub.f32 %v725, %v726
    %v728 = vsub.f32 %v718, %v724
    %v729 = vadd.f32 %v727, 1e-05
    %v730 = vrsqrt.pop %v729
    %v731 = vmul.f32 %v730, %v729
    %v732 = vmul.f32 %v731, %v730
    %v733 = vmul.f32 0.5, %v732
    %v734 = vsub.f32 1.5, %v733
    %v735 = vmul.f32 %v730, %v734
    %vm736 = vweird.f32 %v729
    %vm737 = vweird.f32 %v730
    %vm738 = vmor %vm736, %vm737
    %v739 = vsel %vm738, %v730, %v735
    %v740 = vmul.f32 %v728, %v739
    %v741 = vperm.slane %v616, 0
    %v742 = vmul.f32 %v740, %v741
    %v743 = vperm.slane %v617, 0
    %v744 = vadd.f32 %v742, %v743
    %v745 = vxor.u32 %v744, 2147483648
    %v746 = vmul.f32 %v745, 1.442695
    %v747 = vpow.pop %v746
    %v748 = vadd.f32 %v747, 1.0
    %v749 = vrcp.pop %v748
    %v750 = vmul.f32 %v748, %v749
    %v751 = vsub.f32 1.0, %v750
    %v752 = vmul.f32 %v749, %v751
    %v753 = vadd.f32 %v749, %v752
    %vm754 = vweird.f32 %v748
    %vm755 = vweird.f32 %v749
    %vm756 = vmor %vm754, %vm755
    %v757 = vsel %vm756, %v749, %v753
    %v758 = vand.u32 2147483647, %v748
    %vm759 = vcmp.eq.f32.partialorder %v758, 8.507059e+37
    %v760 = vand.u32 %v748, 2147483648
    %v761 = vor.u32 1.1754944e-38, %v760
    %v762 = vsel %vm759, %v761, %v757
    %v763 = vmul.f32 1.0, %v762
    %v764 = vmul.f32 %v744, %v763
    %v765 = vperm.slane %v618, 0
    %766 = vmatpush.msra.mxu0 %v650
    %767 = vmatpush.msra.mxu0 %v649
    %768 = vmatpush.msra.mxu0 %v648
    %769 = vmatpush.msra.mxu0 %v647
    %770 = vmatpush.msra.mxu0 %v646
    %771 = vmatpush.msra.mxu0 %v645
    %772 = vmatpush.msra.mxu0 %v644
    %773 = vmatpush.msra.mxu0 %v643
    %774 = vmatpush.msra.mxu0 %v642
    %775 = vmatpush.msra.mxu0 %v641
    %776 = vmatpush.msra.mxu0 %v640
    %777 = vmatpush.msra.mxu0 %v639
    %778 = vmatpush.msra.mxu0 %v638
    %779 = vmatpush.msra.mxu0 %v637
    %780 = vmatpush.msra.mxu0 %v636
    %781 = vmatpush.msra.mxu0 %v635
    %782 = vmatmul.f32.gmra.mxu0 %v764
    %v783 = vpop.f32.mrf.mxu0
    %v784 = vadd.f32 %v765, %v783
    %785 = vdwg.mxu0
    %v786 = vadd.f32 %v611, %v784
    %v787 = vld [vmem:[#allocation2 + $0x528] sm:$0x1]
    %v788 = vld [vmem:[#allocation2 + $0x529] sm:$0x1]
    %v789 = vld [vmem:[#allocation2 + $0x52a] sm:$0x1]
    %v790 = vld [vmem:[#allocation2 + $0x52b] sm:$0x1]
    %v791 = vld [vmem:[#allocation2 + $0x52c] sm:$0x1]
    %v792 = vld [vmem:[#allocation2 + $0x52d] sm:$0x1]
    %v793 = vld [vmem:[#allocation2 + $0x428] sm:$0xff]
    %v794 = vld [vmem:[#allocation2 + $0x430] sm:$0xff]
    %v795 = vld [vmem:[#allocation2 + $0x438] sm:$0xff]
    %v796 = vld [vmem:[#allocation2 + $0x440] sm:$0xff]
    %v797 = vld [vmem:[#allocation2 + $0x448] sm:$0xff]
    %v798 = vld [vmem:[#allocation2 + $0x450] sm:$0xff]
    %v799 = vld [vmem:[#allocation2 + $0x458] sm:$0xff]
    %v800 = vld [vmem:[#allocation2 + $0x460] sm:$0xff]
    %v801 = vld [vmem:[#allocation2 + $0x468] sm:$0xff]
    %v802 = vld [vmem:[#allocation2 + $0x470] sm:$0xff]
    %v803 = vld [vmem:[#allocation2 + $0x478] sm:$0xff]
    %v804 = vld [vmem:[#allocation2 + $0x480] sm:$0xff]
    %v805 = vld [vmem:[#allocation2 + $0x488] sm:$0xff]
    %v806 = vld [vmem:[#allocation2 + $0x490] sm:$0xff]
    %v807 = vld [vmem:[#allocation2 + $0x498] sm:$0xff]
    %v808 = vld [vmem:[#allocation2 + $0x4a0] sm:$0xff]
    %v809 = vld [vmem:[#allocation2 + $0x4a8] sm:$0xff]
    %v810 = vld [vmem:[#allocation2 + $0x4b0] sm:$0xff]
    %v811 = vld [vmem:[#allocation2 + $0x4b8] sm:$0xff]
    %v812 = vld [vmem:[#allocation2 + $0x4c0] sm:$0xff]
    %v813 = vld [vmem:[#allocation2 + $0x4c8] sm:$0xff]
    %v814 = vld [vmem:[#allocation2 + $0x4d0] sm:$0xff]
    %v815 = vld [vmem:[#allocation2 + $0x4d8] sm:$0xff]
    %v816 = vld [vmem:[#allocation2 + $0x4e0] sm:$0xff]
    %v817 = vld [vmem:[#allocation2 + $0x4e8] sm:$0xff]
    %v818 = vld [vmem:[#allocation2 + $0x4f0] sm:$0xff]
    %v819 = vld [vmem:[#allocation2 + $0x4f8] sm:$0xff]
    %v820 = vld [vmem:[#allocation2 + $0x500] sm:$0xff]
    %v821 = vld [vmem:[#allocation2 + $0x508] sm:$0xff]
    %v822 = vld [vmem:[#allocation2 + $0x510] sm:$0xff]
    %v823 = vld [vmem:[#allocation2 + $0x518] sm:$0xff]
    %v824 = vld [vmem:[#allocation2 + $0x520] sm:$0xff]
    %825 = vadd.xlane.f32.xlu0 %v786
    %v826 = vpop.xlane.xlu0 %825
    %v827 = vmul.f32 %v786, %v786
    %828 = vadd.xlane.f32.xlu0 %v827
    %v829 = vpop.xlane.xlu0 %828
    %v830 = vmul.f32 %v826, 0.03125
    %v831 = vmul.f32 %v829, 0.03125
    %v832 = vmul.f32 %v830, %v830
    %v833 = vsub.f32 %v831, %v832
    %v834 = vsub.f32 %v786, %v830
    %v835 = vadd.f32 %v833, 1e-05
    %v836 = vrsqrt.pop %v835
    %v837 = vmul.f32 %v836, %v835
    %v838 = vmul.f32 %v837, %v836
    %v839 = vmul.f32 0.5, %v838
    %v840 = vsub.f32 1.5, %v839
    %v841 = vmul.f32 %v836, %v840
    %vm842 = vweird.f32 %v835
    %vm843 = vweird.f32 %v836
    %vm844 = vmor %vm842, %vm843
    %v845 = vsel %vm844, %v836, %v841
    %v846 = vmul.f32 %v834, %v845
    %v847 = vperm.slane %v787, 0
    %v848 = vmul.f32 %v846, %v847
    %v849 = vperm.slane %v788, 0
    %v850 = vadd.f32 %v848, %v849
    %v851 = vxor.u32 %v850, 2147483648
    %v852 = vmul.f32 %v851, 1.442695
    %v853 = vpow.pop %v852
    %v854 = vadd.f32 %v853, 1.0
    %v855 = vrcp.pop %v854
    %v856 = vmul.f32 %v854, %v855
    %v857 = vsub.f32 1.0, %v856
    %v858 = vmul.f32 %v855, %v857
    %v859 = vadd.f32 %v855, %v858
    %vm860 = vweird.f32 %v854
    %vm861 = vweird.f32 %v855
    %vm862 = vmor %vm860, %vm861
    %v863 = vsel %vm862, %v855, %v859
    %v864 = vand.u32 2147483647, %v854
    %vm865 = vcmp.eq.f32.partialorder %v864, 8.507059e+37
    %v866 = vand.u32 %v854, 2147483648
    %v867 = vor.u32 1.1754944e-38, %v866
    %v868 = vsel %vm865, %v867, %v863
    %v869 = vmul.f32 1.0, %v868
    %v870 = vmul.f32 %v850, %v869
    %v871 = vperm.slane %v789, 0
    %872 = vmatpush.msra.mxu0 %v808
    %873 = vmatpush.msra.mxu0 %v807
    %874 = vmatpush.msra.mxu0 %v806
    %875 = vmatpush.msra.mxu0 %v805
    %876 = vmatpush.msra.mxu0 %v804
    %877 = vmatpush.msra.mxu0 %v803
    %878 = vmatpush.msra.mxu0 %v802
    %879 = vmatpush.msra.mxu0 %v801
    %880 = vmatpush.msra.mxu0 %v800
    %881 = vmatpush.msra.mxu0 %v799
    %882 = vmatpush.msra.mxu0 %v798
    %883 = vmatpush.msra.mxu0 %v797
    %884 = vmatpush.msra.mxu0 %v796
    %885 = vmatpush.msra.mxu0 %v795
    %886 = vmatpush.msra.mxu0 %v794
    %887 = vmatpush.msra.mxu0 %v793
    %888 = vmatmul.f32.gmra.mxu0 %v870
    %v889 = vpop.f32.mrf.mxu0
    %v890 = vadd.f32 %v871, %v889
    %891 = vdwg.mxu0
    %v892 = vadd.f32 %v890, %v320
    %893 = vadd.xlane.f32.xlu0 %v892
    %v894 = vpop.xlane.xlu0 %893
    %v895 = vmul.f32 %v892, %v892
    %896 = vadd.xlane.f32.xlu0 %v895
    %v897 = vpop.xlane.xlu0 %896
    %v898 = vmul.f32 %v894, 0.03125
    %v899 = vmul.f32 %v897, 0.03125
    %v900 = vmul.f32 %v898, %v898
    %v901 = vsub.f32 %v899, %v900
    %v902 = vsub.f32 %v892, %v898
    %v903 = vadd.f32 %v901, 1e-05
    %v904 = vrsqrt.pop %v903
    %v905 = vmul.f32 %v904, %v903
    %v906 = vmul.f32 %v905, %v904
    %v907 = vmul.f32 0.5, %v906
    %v908 = vsub.f32 1.5, %v907
    %v909 = vmul.f32 %v904, %v908
    %vm910 = vweird.f32 %v903
    %vm911 = vweird.f32 %v904
    %vm912 = vmor %vm910, %vm911
    %v913 = vsel %vm912, %v904, %v909
    %v914 = vmul.f32 %v902, %v913
    %v915 = vperm.slane %v790, 0
    %v916 = vmul.f32 %v914, %v915
    %v917 = vperm.slane %v791, 0
    %v918 = vadd.f32 %v916, %v917
    %v919 = vxor.u32 %v918, 2147483648
    %v920 = vmul.f32 %v919, 1.442695
    %v921 = vpow.pop %v920
    %v922 = vadd.f32 %v921, 1.0
    %v923 = vrcp.pop %v922
    %v924 = vmul.f32 %v922, %v923
    %v925 = vsub.f32 1.0, %v924
    %v926 = vmul.f32 %v923, %v925
    %v927 = vadd.f32 %v923, %v926
    %vm928 = vweird.f32 %v922
    %vm929 = vweird.f32 %v923
    %vm930 = vmor %vm928, %vm929
    %v931 = vsel %vm930, %v923, %v927
    %v932 = vand.u32 2147483647, %v922
    %vm933 = vcmp.eq.f32.partialorder %v932, 8.507059e+37
    %v934 = vand.u32 %v922, 2147483648
    %v935 = vor.u32 1.1754944e-38, %v934
    %v936 = vsel %vm933, %v935, %v931
    %v937 = vmul.f32 1.0, %v936
    %v938 = vmul.f32 %v918, %v937
    %v939 = vperm.slane %v792, 0
    %940 = vmatpush.msra.mxu0 %v824
    %941 = vmatpush.msra.mxu0 %v823
    %942 = vmatpush.msra.mxu0 %v822
    %943 = vmatpush.msra.mxu0 %v821
    %944 = vmatpush.msra.mxu0 %v820
    %945 = vmatpush.msra.mxu0 %v819
    %946 = vmatpush.msra.mxu0 %v818
    %947 = vmatpush.msra.mxu0 %v817
    %948 = vmatpush.msra.mxu0 %v816
    %949 = vmatpush.msra.mxu0 %v815
    %950 = vmatpush.msra.mxu0 %v814
    %951 = vmatpush.msra.mxu0 %v813
    %952 = vmatpush.msra.mxu0 %v812
    %953 = vmatpush.msra.mxu0 %v811
    %954 = vmatpush.msra.mxu0 %v810
    %955 = vmatpush.msra.mxu0 %v809
    %956 = vmatmul.f32.gmra.mxu0 %v938
    %v957 = vpop.f32.mrf.mxu0
    %v958 = vadd.f32 %v939, %v957
    %959 = vdwg.mxu0
    %v960 = vadd.f32 %v786, %v958
    %v961 = vld [vmem:[#allocation2 + $0x530] sm:$0xff]
    %v962 = vld [vmem:[#allocation2 + $0x538] sm:$0xff]
    %v963 = vld [vmem:[#allocation2 + $0x540] sm:$0xff]
    %v964 = vld [vmem:[#allocation2 + $0x548] sm:$0xff]
    %v965 = vld [vmem:[#allocation2 + $0x550] sm:$0xff]
    %v966 = vld [vmem:[#allocation2 + $0x558] sm:$0xff]
    %v967 = vld [vmem:[#allocation2 + $0x560] sm:$0xff]
    %v968 = vld [vmem:[#allocation2 + $0x568] sm:$0xff]
    %v969 = vld [vmem:[#allocation2 + $0x570] sm:$0xff]
    %v970 = vld [vmem:[#allocation2 + $0x578] sm:$0xff]
    %v971 = vld [vmem:[#allocation2 + $0x580] sm:$0xff]
    %v972 = vld [vmem:[#allocation2 + $0x588] sm:$0xff]
    %v973 = vld [vmem:[#allocation2 + $0x590] sm:$0xff]
    %v974 = vld [vmem:[#allocation2 + $0x598] sm:$0xff]
    %v975 = vld [vmem:[#allocation2 + $0x5a0] sm:$0xff]
    %v976 = vld [vmem:[#allocation2 + $0x5a8] sm:$0xff]
    %v977 = vld [vmem:[#allocation2 + $0x5b0] sm:$0x1]
    %v978 = vperm.slane %v977, 0
    %979 = vmatpush.msra.mxu0 %v976
    %980 = vmatpush.msra.mxu0 %v975
    %981 = vmatpush.msra.mxu0 %v974
    %982 = vmatpush.msra.mxu0 %v973
    %983 = vmatpush.msra.mxu0 %v972
    %984 = vmatpush.msra.mxu0 %v971
    %985 = vmatpush.msra.mxu0 %v970
    %986 = vmatpush.msra.mxu0 %v969
    %987 = vmatpush.msra.mxu0 %v968
    %988 = vmatpush.msra.mxu0 %v967
    %989 = vmatpush.msra.mxu0 %v966
    %990 = vmatpush.msra.mxu0 %v965
    %991 = vmatpush.msra.mxu0 %v964
    %992 = vmatpush.msra.mxu0 %v963
    %993 = vmatpush.msra.mxu0 %v962
    %994 = vmatpush.msra.mxu0 %v961
    %995 = vmatmul.f32.gmra.mxu0 %v960
    %v996 = vpop.f32.mrf.mxu0
    %v997 = vadd.f32 %v978, %v996
    %998 = vdwg.mxu0
    %v999 = vld [vmem:[#allocation2 + $0x6b8] sm:$0x1]
    %v1000 = vld [vmem:[#allocation2 + $0x6b9] sm:$0x1]
    %v1001 = vld [vmem:[#allocation2 + $0x6ba] sm:$0x1]
    %v1002 = vld [vmem:[#allocation2 + $0x6bb] sm:$0x1]
    %v1003 = vld [vmem:[#allocation2 + $0x6bc] sm:$0x1]
    %v1004 = vld [vmem:[#allocation2 + $0x6bd] sm:$0x1]
    %v1005 = vld [vmem:[#allocation2 + $0x5b8] sm:$0xff]
    %v1006 = vld [vmem:[#allocation2 + $0x5c0] sm:$0xff]
    %v1007 = vld [vmem:[#allocation2 + $0x5c8] sm:$0xff]
    %v1008 = vld [vmem:[#allocation2 + $0x5d0] sm:$0xff]
    %v1009 = vld [vmem:[#allocation2 + $0x5d8] sm:$0xff]
    %v1010 = vld [vmem:[#allocation2 + $0x5e0] sm:$0xff]
    %v1011 = vld [vmem:[#allocation2 + $0x5e8] sm:$0xff]
    %v1012 = vld [vmem:[#allocation2 + $0x5f0] sm:$0xff]
    %v1013 = vld [vmem:[#allocation2 + $0x5f8] sm:$0xff]
    %v1014 = vld [vmem:[#allocation2 + $0x600] sm:$0xff]
    %v1015 = vld [vmem:[#allocation2 + $0x608] sm:$0xff]
    %v1016 = vld [vmem:[#allocation2 + $0x610] sm:$0xff]
    %v1017 = vld [vmem:[#allocation2 + $0x618] sm:$0xff]
    %v1018 = vld [vmem:[#allocation2 + $0x620] sm:$0xff]
    %v1019 = vld [vmem:[#allocation2 + $0x628] sm:$0xff]
    %v1020 = vld [vmem:[#allocation2 + $0x630] sm:$0xff]
    %v1021 = vld [vmem:[#allocation2 + $0x638] sm:$0xff]
    %v1022 = vld [vmem:[#allocation2 + $0x640] sm:$0xff]
    %v1023 = vld [vmem:[#allocation2 + $0x648] sm:$0xff]
    %v1024 = vld [vmem:[#allocation2 + $0x650] sm:$0xff]
    %v1025 = vld [vmem:[#allocation2 + $0x658] sm:$0xff]
    %v1026 = vld [vmem:[#allocation2 + $0x660] sm:$0xff]
    %v1027 = vld [vmem:[#allocation2 + $0x668] sm:$0xff]
    %v1028 = vld [vmem:[#allocation2 + $0x670] sm:$0xff]
    %v1029 = vld [vmem:[#allocation2 + $0x678] sm:$0xff]
    %v1030 = vld [vmem:[#allocation2 + $0x680] sm:$0xff]
    %v1031 = vld [vmem:[#allocation2 + $0x688] sm:$0xff]
    %v1032 = vld [vmem:[#allocation2 + $0x690] sm:$0xff]
    %v1033 = vld [vmem:[#allocation2 + $0x698] sm:$0xff]
    %v1034 = vld [vmem:[#allocation2 + $0x6a0] sm:$0xff]
    %v1035 = vld [vmem:[#allocation2 + $0x6a8] sm:$0xff]
    %v1036 = vld [vmem:[#allocation2 + $0x6b0] sm:$0xff]
    %1037 = vadd.xlane.f32.xlu0 %v997
    %v1038 = vpop.xlane.xlu0 %1037
    %v1039 = vmul.f32 %v997, %v997
    %1040 = vadd.xlane.f32.xlu0 %v1039
    %v1041 = vpop.xlane.xlu0 %1040
    %v1042 = vmul.f32 %v1038, 0.03125
    %v1043 = vmul.f32 %v1041, 0.03125
    %v1044 = vmul.f32 %v1042, %v1042
    %v1045 = vsub.f32 %v1043, %v1044
    %v1046 = vsub.f32 %v997, %v1042
    %v1047 = vadd.f32 %v1045, 1e-05
    %v1048 = vrsqrt.pop %v1047
    %v1049 = vmul.f32 %v1048, %v1047
    %v1050 = vmul.f32 %v1049, %v1048
    %v1051 = vmul.f32 0.5, %v1050
    %v1052 = vsub.f32 1.5, %v1051
    %v1053 = vmul.f32 %v1048, %v1052
    %vm1054 = vweird.f32 %v1047
    %vm1055 = vweird.f32 %v1048
    %vm1056 = vmor %vm1054, %vm1055
    %v1057 = vsel %vm1056, %v1048, %v1053
    %v1058 = vmul.f32 %v1046, %v1057
    %v1059 = vperm.slane %v999, 0
    %v1060 = vmul.f32 %v1058, %v1059
    %v1061 = vperm.slane %v1000, 0
    %v1062 = vadd.f32 %v1060, %v1061
    %v1063 = vxor.u32 %v1062, 2147483648
    %v1064 = vmul.f32 %v1063, 1.442695
    %v1065 = vpow.pop %v1064
    %v1066 = vadd.f32 %v1065, 1.0
    %v1067 = vrcp.pop %v1066
    %v1068 = vmul.f32 %v1066, %v1067
    %v1069 = vsub.f32 1.0, %v1068
    %v1070 = vmul.f32 %v1067, %v1069
    %v1071 = vadd.f32 %v1067, %v1070
    %vm1072 = vweird.f32 %v1066
    %vm1073 = vweird.f32 %v1067
    %vm1074 = vmor %vm1072, %vm1073
    %v1075 = vsel %vm1074, %v1067, %v1071
    %v1076 = vand.u32 2147483647, %v1066
    %vm1077 = vcmp.eq.f32.partialorder %v1076, 8.507059e+37
    %v1078 = vand.u32 %v1066, 2147483648
    %v1079 = vor.u32 1.1754944e-38, %v1078
    %v1080 = vsel %vm1077, %v1079, %v1075
    %v1081 = vmul.f32 1.0, %v1080
    %v1082 = vmul.f32 %v1062, %v1081
    %v1083 = vperm.slane %v1001, 0
    %1084 = vmatpush.msra.mxu0 %v1020
    %1085 = vmatpush.msra.mxu0 %v1019
    %1086 = vmatpush.msra.mxu0 %v1018
    %1087 = vmatpush.msra.mxu0 %v1017
    %1088 = vmatpush.msra.mxu0 %v1016
    %1089 = vmatpush.msra.mxu0 %v1015
    %1090 = vmatpush.msra.mxu0 %v1014
    %1091 = vmatpush.msra.mxu0 %v1013
    %1092 = vmatpush.msra.mxu0 %v1012
    %1093 = vmatpush.msra.mxu0 %v1011
    %1094 = vmatpush.msra.mxu0 %v1010
    %1095 = vmatpush.msra.mxu0 %v1009
    %1096 = vmatpush.msra.mxu0 %v1008
    %1097 = vmatpush.msra.mxu0 %v1007
    %1098 = vmatpush.msra.mxu0 %v1006
    %1099 = vmatpush.msra.mxu0 %v1005
    %1100 = vmatmul.f32.gmra.mxu0 %v1082
    %v1101 = vpop.f32.mrf.mxu0
    %v1102 = vadd.f32 %v1083, %v1101
    %1103 = vdwg.mxu0
    %v1104 = vadd.f32 %v1102, %v340
    %1105 = vadd.xlane.f32.xlu0 %v1104
    %v1106 = vpop.xlane.xlu0 %1105
    %v1107 = vmul.f32 %v1104, %v1104
    %1108 = vadd.xlane.f32.xlu0 %v1107
    %v1109 = vpop.xlane.xlu0 %1108
    %v1110 = vmul.f32 %v1106, 0.03125
    %v1111 = vmul.f32 %v1109, 0.03125
    %v1112 = vmul.f32 %v1110, %v1110
    %v1113 = vsub.f32 %v1111, %v1112
    %v1114 = vsub.f32 %v1104, %v1110
    %v1115 = vadd.f32 %v1113, 1e-05
    %v1116 = vrsqrt.pop %v1115
    %v1117 = vmul.f32 %v1116, %v1115
    %v1118 = vmul.f32 %v1117, %v1116
    %v1119 = vmul.f32 0.5, %v1118
    %v1120 = vsub.f32 1.5, %v1119
    %v1121 = vmul.f32 %v1116, %v1120
    %vm1122 = vweird.f32 %v1115
    %vm1123 = vweird.f32 %v1116
    %vm1124 = vmor %vm1122, %vm1123
    %v1125 = vsel %vm1124, %v1116, %v1121
    %v1126 = vmul.f32 %v1114, %v1125
    %v1127 = vperm.slane %v1002, 0
    %v1128 = vmul.f32 %v1126, %v1127
    %v1129 = vperm.slane %v1003, 0
    %v1130 = vadd.f32 %v1128, %v1129
    %v1131 = vxor.u32 %v1130, 2147483648
    %v1132 = vmul.f32 %v1131, 1.442695
    %v1133 = vpow.pop %v1132
    %v1134 = vadd.f32 %v1133, 1.0
    %v1135 = vrcp.pop %v1134
    %v1136 = vmul.f32 %v1134, %v1135
    %v1137 = vsub.f32 1.0, %v1136
    %v1138 = vmul.f32 %v1135, %v1137
    %v1139 = vadd.f32 %v1135, %v1138
    %vm1140 = vweird.f32 %v1134
    %vm1141 = vweird.f32 %v1135
    %vm1142 = vmor %vm1140, %vm1141
    %v1143 = vsel %vm1142, %v1135, %v1139
    %v1144 = vand.u32 2147483647, %v1134
    %vm1145 = vcmp.eq.f32.partialorder %v1144, 8.507059e+37
    %v1146 = vand.u32 %v1134, 2147483648
    %v1147 = vor.u32 1.1754944e-38, %v1146
    %v1148 = vsel %vm1145, %v1147, %v1143
    %v1149 = vmul.f32 1.0, %v1148
    %v1150 = vmul.f32 %v1130, %v1149
    %v1151 = vperm.slane %v1004, 0
    %1152 = vmatpush.msra.mxu0 %v1036
    %1153 = vmatpush.msra.mxu0 %v1035
    %1154 = vmatpush.msra.mxu0 %v1034
    %1155 = vmatpush.msra.mxu0 %v1033
    %1156 = vmatpush.msra.mxu0 %v1032
    %1157 = vmatpush.msra.mxu0 %v1031
    %1158 = vmatpush.msra.mxu0 %v1030
    %1159 = vmatpush.msra.mxu0 %v1029
    %1160 = vmatpush.msra.mxu0 %v1028
    %1161 = vmatpush.msra.mxu0 %v1027
    %1162 = vmatpush.msra.mxu0 %v1026
    %1163 = vmatpush.msra.mxu0 %v1025
    %1164 = vmatpush.msra.mxu0 %v1024
    %1165 = vmatpush.msra.mxu0 %v1023
    %1166 = vmatpush.msra.mxu0 %v1022
    %1167 = vmatpush.msra.mxu0 %v1021
    %1168 = vmatmul.f32.gmra.mxu0 %v1150
    %v1169 = vpop.f32.mrf.mxu0
    %v1170 = vadd.f32 %v1151, %v1169
    %1171 = vdwg.mxu0
    %v1172 = vadd.f32 %v997, %v1170
    %v1173 = vld [vmem:[#allocation2 + $0x6c0] sm:$0xff]
    %v1174 = vld [vmem:[#allocation2 + $0x6c8] sm:$0xff]
    %v1175 = vld [vmem:[#allocation2 + $0x6d0] sm:$0xff]
    %v1176 = vld [vmem:[#allocation2 + $0x6d8] sm:$0xff]
    %v1177 = vld [vmem:[#allocation2 + $0x6e0] sm:$0xff]
    %v1178 = vld [vmem:[#allocation2 + $0x6e8] sm:$0xff]
    %v1179 = vld [vmem:[#allocation2 + $0x6f0] sm:$0xff]
    %v1180 = vld [vmem:[#allocation2 + $0x6f8] sm:$0xff]
    %v1181 = vld [vmem:[#allocation2 + $0x700] sm:$0xff]
    %v1182 = vld [vmem:[#allocation2 + $0x708] sm:$0xff]
    %v1183 = vld [vmem:[#allocation2 + $0x710] sm:$0xff]
    %v1184 = vld [vmem:[#allocation2 + $0x718] sm:$0xff]
    %v1185 = vld [vmem:[#allocation2 + $0x720] sm:$0xff]
    %v1186 = vld [vmem:[#allocation2 + $0x728] sm:$0xff]
    %v1187 = vld [vmem:[#allocation2 + $0x730] sm:$0xff]
    %v1188 = vld [vmem:[#allocation2 + $0x738] sm:$0xff]
    %v1189 = vld [vmem:[#allocation2 + $0x740] sm:$0x1]
    %v1190 = vperm.slane %v1189, 0
    %1191 = vmatpush.msra.mxu0 %v1188
    %1192 = vmatpush.msra.mxu0 %v1187
    %1193 = vmatpush.msra.mxu0 %v1186
    %1194 = vmatpush.msra.mxu0 %v1185
    %1195 = vmatpush.msra.mxu0 %v1184
    %1196 = vmatpush.msra.mxu0 %v1183
    %1197 = vmatpush.msra.mxu0 %v1182
    %1198 = vmatpush.msra.mxu0 %v1181
    %1199 = vmatpush.msra.mxu0 %v1180
    %1200 = vmatpush.msra.mxu0 %v1179
    %1201 = vmatpush.msra.mxu0 %v1178
    %1202 = vmatpush.msra.mxu0 %v1177
    %1203 = vmatpush.msra.mxu0 %v1176
    %1204 = vmatpush.msra.mxu0 %v1175
    %1205 = vmatpush.msra.mxu0 %v1174
    %1206 = vmatpush.msra.mxu0 %v1173
    %1207 = vmatmul.f32.gmra.mxu0 %v1172
    %v1208 = vpop.f32.mrf.mxu0
    %v1209 = vadd.f32 %v1190, %v1208
    %1210 = vdwg.mxu0
    %v1211 = vld [vmem:[#allocation2 + $0x848] sm:$0x1]
    %v1212 = vld [vmem:[#allocation2 + $0x849] sm:$0x1]
    %v1213 = vld [vmem:[#allocation2 + $0x84a] sm:$0x1]
    %v1214 = vld [vmem:[#allocation2 + $0x84b] sm:$0x1]
    %v1215 = vld [vmem:[#allocation2 + $0x84c] sm:$0x1]
    %v1216 = vld [vmem:[#allocation2 + $0x84d] sm:$0x1]
    %v1217 = vld [vmem:[#allocation2 + $0x748] sm:$0xff]
    %v1218 = vld [vmem:[#allocation2 + $0x750] sm:$0xff]
    %v1219 = vld [vmem:[#allocation2 + $0x758] sm:$0xff]
    %v1220 = vld [vmem:[#allocation2 + $0x760] sm:$0xff]
    %v1221 = vld [vmem:[#allocation2 + $0x768] sm:$0xff]
    %v1222 = vld [vmem:[#allocation2 + $0x770] sm:$0xff]
    %v1223 = vld [vmem:[#allocation2 + $0x778] sm:$0xff]
    %v1224 = vld [vmem:[#allocation2 + $0x780] sm:$0xff]
    %v1225 = vld [vmem:[#allocation2 + $0x788] sm:$0xff]
    %v1226 = vld [vmem:[#allocation2 + $0x790] sm:$0xff]
    %v1227 = vld [vmem:[#allocation2 + $0x798] sm:$0xff]
    %v1228 = vld [vmem:[#allocation2 + $0x7a0] sm:$0xff]
    %v1229 = vld [vmem:[#allocation2 + $0x7a8] sm:$0xff]
    %v1230 = vld [vmem:[#allocation2 + $0x7b0] sm:$0xff]
    %v1231 = vld [vmem:[#allocation2 + $0x7b8] sm:$0xff]
    %v1232 = vld [vmem:[#allocation2 + $0x7c0] sm:$0xff]
    %v1233 = vld [vmem:[#allocation2 + $0x7c8] sm:$0xff]
    %v1234 = vld [vmem:[#allocation2 + $0x7d0] sm:$0xff]
    %v1235 = vld [vmem:[#allocation2 + $0x7d8] sm:$0xff]
    %v1236 = vld [vmem:[#allocation2 + $0x7e0] sm:$0xff]
    %v1237 = vld [vmem:[#allocation2 + $0x7e8] sm:$0xff]
    %v1238 = vld [vmem:[#allocation2 + $0x7f0] sm:$0xff]
    %v1239 = vld [vmem:[#allocation2 + $0x7f8] sm:$0xff]
    %v1240 = vld [vmem:[#allocation2 + $0x800] sm:$0xff]
    %v1241 = vld [vmem:[#allocation2 + $0x808] sm:$0xff]
    %v1242 = vld [vmem:[#allocation2 + $0x810] sm:$0xff]
    %v1243 = vld [vmem:[#allocation2 + $0x818] sm:$0xff]
    %v1244 = vld [vmem:[#allocation2 + $0x820] sm:$0xff]
    %v1245 = vld [vmem:[#allocation2 + $0x828] sm:$0xff]
    %v1246 = vld [vmem:[#allocation2 + $0x830] sm:$0xff]
    %v1247 = vld [vmem:[#allocation2 + $0x838] sm:$0xff]
    %v1248 = vld [vmem:[#allocation2 + $0x840] sm:$0xff]
    %1249 = vadd.xlane.f32.xlu0 %v1209
    %v1250 = vpop.xlane.xlu0 %1249
    %v1251 = vmul.f32 %v1209, %v1209
    %1252 = vadd.xlane.f32.xlu0 %v1251
    %v1253 = vpop.xlane.xlu0 %1252
    %v1254 = vmul.f32 %v1250, 0.015625
    %v1255 = vmul.f32 %v1253, 0.015625
    %v1256 = vmul.f32 %v1254, %v1254
    %v1257 = vsub.f32 %v1255, %v1256
    %v1258 = vsub.f32 %v1209, %v1254
    %v1259 = vadd.f32 %v1257, 1e-05
    %v1260 = vrsqrt.pop %v1259
    %v1261 = vmul.f32 %v1260, %v1259
    %v1262 = vmul.f32 %v1261, %v1260
    %v1263 = vmul.f32 0.5, %v1262
    %v1264 = vsub.f32 1.5, %v1263
    %v1265 = vmul.f32 %v1260, %v1264
    %vm1266 = vweird.f32 %v1259
    %vm1267 = vweird.f32 %v1260
    %vm1268 = vmor %vm1266, %vm1267
    %v1269 = vsel %vm1268, %v1260, %v1265
    %v1270 = vmul.f32 %v1258, %v1269
    %v1271 = vperm.slane %v1211, 0
    %v1272 = vmul.f32 %v1270, %v1271
    %v1273 = vperm.slane %v1212, 0
    %v1274 = vadd.f32 %v1272, %v1273
    %v1275 = vxor.u32 %v1274, 2147483648
    %v1276 = vmul.f32 %v1275, 1.442695
    %v1277 = vpow.pop %v1276
    %v1278 = vadd.f32 %v1277, 1.0
    %v1279 = vrcp.pop %v1278
    %v1280 = vmul.f32 %v1278, %v1279
    %v1281 = vsub.f32 1.0, %v1280
    %v1282 = vmul.f32 %v1279, %v1281
    %v1283 = vadd.f32 %v1279, %v1282
    %vm1284 = vweird.f32 %v1278
    %vm1285 = vweird.f32 %v1279
    %vm1286 = vmor %vm1284, %vm1285
    %v1287 = vsel %vm1286, %v1279, %v1283
    %v1288 = vand.u32 2147483647, %v1278
    %vm1289 = vcmp.eq.f32.partialorder %v1288, 8.507059e+37
    %v1290 = vand.u32 %v1278, 2147483648
    %v1291 = vor.u32 1.1754944e-38, %v1290
    %v1292 = vsel %vm1289, %v1291, %v1287
    %v1293 = vmul.f32 1.0, %v1292
    %v1294 = vmul.f32 %v1274, %v1293
    %v1295 = vperm.slane %v1213, 0
    %1296 = vmatpush.msra.mxu0 %v1232
    %1297 = vmatpush.msra.mxu0 %v1231
    %1298 = vmatpush.msra.mxu0 %v1230
    %1299 = vmatpush.msra.mxu0 %v1229
    %1300 = vmatpush.msra.mxu0 %v1228
    %1301 = vmatpush.msra.mxu0 %v1227
    %1302 = vmatpush.msra.mxu0 %v1226
    %1303 = vmatpush.msra.mxu0 %v1225
    %1304 = vmatpush.msra.mxu0 %v1224
    %1305 = vmatpush.msra.mxu0 %v1223
    %1306 = vmatpush.msra.mxu0 %v1222
    %1307 = vmatpush.msra.mxu0 %v1221
    %1308 = vmatpush.msra.mxu0 %v1220
    %1309 = vmatpush.msra.mxu0 %v1219
    %1310 = vmatpush.msra.mxu0 %v1218
    %1311 = vmatpush.msra.mxu0 %v1217
    %1312 = vmatmul.f32.gmra.mxu0 %v1294
    %v1313 = vpop.f32.mrf.mxu0
    %v1314 = vadd.f32 %v1295, %v1313
    %1315 = vdwg.mxu0
    %v1316 = vadd.f32 %v1314, %v360
    %1317 = vadd.xlane.f32.xlu0 %v1316
    %v1318 = vpop.xlane.xlu0 %1317
    %v1319 = vmul.f32 %v1316, %v1316
    %1320 = vadd.xlane.f32.xlu0 %v1319
    %v1321 = vpop.xlane.xlu0 %1320
    %v1322 = vmul.f32 %v1318, 0.015625
    %v1323 = vmul.f32 %v1321, 0.015625
    %v1324 = vmul.f32 %v1322, %v1322
    %v1325 = vsub.f32 %v1323, %v1324
    %v1326 = vsub.f32 %v1316, %v1322
    %v1327 = vadd.f32 %v1325, 1e-05
    %v1328 = vrsqrt.pop %v1327
    %v1329 = vmul.f32 %v1328, %v1327
    %v1330 = vmul.f32 %v1329, %v1328
    %v1331 = vmul.f32 0.5, %v1330
    %v1332 = vsub.f32 1.5, %v1331
    %v1333 = vmul.f32 %v1328, %v1332
    %vm1334 = vweird.f32 %v1327
    %vm1335 = vweird.f32 %v1328
    %vm1336 = vmor %vm1334, %vm1335
    %v1337 = vsel %vm1336, %v1328, %v1333
    %v1338 = vmul.f32 %v1326, %v1337
    %v1339 = vperm.slane %v1214, 0
    %v1340 = vmul.f32 %v1338, %v1339
    %v1341 = vperm.slane %v1215, 0
    %v1342 = vadd.f32 %v1340, %v1341
    %v1343 = vxor.u32 %v1342, 2147483648
    %v1344 = vmul.f32 %v1343, 1.442695
    %v1345 = vpow.pop %v1344
    %v1346 = vadd.f32 %v1345, 1.0
    %v1347 = vrcp.pop %v1346
    %v1348 = vmul.f32 %v1346, %v1347
    %v1349 = vsub.f32 1.0, %v1348
    %v1350 = vmul.f32 %v1347, %v1349
    %v1351 = vadd.f32 %v1347, %v1350
    %vm1352 = vweird.f32 %v1346
    %vm1353 = vweird.f32 %v1347
    %vm1354 = vmor %vm1352, %vm1353
    %v1355 = vsel %vm1354, %v1347, %v1351
    %v1356 = vand.u32 2147483647, %v1346
    %vm1357 = vcmp.eq.f32.partialorder %v1356, 8.507059e+37
    %v1358 = vand.u32 %v1346, 2147483648
    %v1359 = vor.u32 1.1754944e-38, %v1358
    %v1360 = vsel %vm1357, %v1359, %v1355
    %v1361 = vmul.f32 1.0, %v1360
    %v1362 = vmul.f32 %v1342, %v1361
    %v1363 = vperm.slane %v1216, 0
    %1364 = vmatpush.msra.mxu0 %v1248
    %1365 = vmatpush.msra.mxu0 %v1247
    %1366 = vmatpush.msra.mxu0 %v1246
    %1367 = vmatpush.msra.mxu0 %v1245
    %1368 = vmatpush.msra.mxu0 %v1244
    %1369 = vmatpush.msra.mxu0 %v1243
    %1370 = vmatpush.msra.mxu0 %v1242
    %1371 = vmatpush.msra.mxu0 %v1241
    %1372 = vmatpush.msra.mxu0 %v1240
    %1373 = vmatpush.msra.mxu0 %v1239
    %1374 = vmatpush.msra.mxu0 %v1238
    %1375 = vmatpush.msra.mxu0 %v1237
    %1376 = vmatpush.msra.mxu0 %v1236
    %1377 = vmatpush.msra.mxu0 %v1235
    %1378 = vmatpush.msra.mxu0 %v1234
    %1379 = vmatpush.msra.mxu0 %v1233
    %1380 = vmatmul.f32.gmra.mxu0 %v1362
    %v1381 = vpop.f32.mrf.mxu0
    %v1382 = vadd.f32 %v1363, %v1381
    %1383 = vdwg.mxu0
    %v1384 = vadd.f32 %v1209, %v1382
    %v1385 = vld [vmem:[#allocation2 + $0x850] sm:$0xff]
    %v1386 = vld [vmem:[#allocation2 + $0x858] sm:$0xff]
    %v1387 = vld [vmem:[#allocation2 + $0x860] sm:$0xff]
    %v1388 = vld [vmem:[#allocation2 + $0x868] sm:$0xff]
    %v1389 = vld [vmem:[#allocation2 + $0x870] sm:$0xff]
    %v1390 = vld [vmem:[#allocation2 + $0x878] sm:$0xff]
    %v1391 = vld [vmem:[#allocation2 + $0x880] sm:$0xff]
    %v1392 = vld [vmem:[#allocation2 + $0x888] sm:$0xff]
    %v1393 = vld [vmem:[#allocation2 + $0x890] sm:$0xff]
    %v1394 = vld [vmem:[#allocation2 + $0x898] sm:$0xff]
    %v1395 = vld [vmem:[#allocation2 + $0x8a0] sm:$0xff]
    %v1396 = vld [vmem:[#allocation2 + $0x8a8] sm:$0xff]
    %v1397 = vld [vmem:[#allocation2 + $0x8b0] sm:$0xff]
    %v1398 = vld [vmem:[#allocation2 + $0x8b8] sm:$0xff]
    %v1399 = vld [vmem:[#allocation2 + $0x8c0] sm:$0xff]
    %v1400 = vld [vmem:[#allocation2 + $0x8c8] sm:$0xff]
    %v1401 = vld [vmem:[#allocation2 + $0x8d0] sm:$0x1]
    %v1402 = vperm.slane %v1401, 0
    %1403 = vmatpush.msra.mxu0 %v1400
    %1404 = vmatpush.msra.mxu0 %v1399
    %1405 = vmatpush.msra.mxu0 %v1398
    %1406 = vmatpush.msra.mxu0 %v1397
    %1407 = vmatpush.msra.mxu0 %v1396
    %1408 = vmatpush.msra.mxu0 %v1395
    %1409 = vmatpush.msra.mxu0 %v1394
    %1410 = vmatpush.msra.mxu0 %v1393
    %1411 = vmatpush.msra.mxu0 %v1392
    %1412 = vmatpush.msra.mxu0 %v1391
    %1413 = vmatpush.msra.mxu0 %v1390
    %1414 = vmatpush.msra.mxu0 %v1389
    %1415 = vmatpush.msra.mxu0 %v1388
    %1416 = vmatpush.msra.mxu0 %v1387
    %1417 = vmatpush.msra.mxu0 %v1386
    %1418 = vmatpush.msra.mxu0 %v1385
    %1419 = vmatmul.f32.gmra.mxu0 %v1384
    %v1420 = vpop.f32.mrf.mxu0
    %v1421 = vadd.f32 %v1402, %v1420
    %1422 = vdwg.mxu0
    %1423 = vst [vmem:[#allocation7] sm:$0xff] %v1421
    // Predicated region
    $region26: #{diffcdr_forward.1} parent=1 // pred_check
      _
    $region27: #{diffcdr_forward.1} parent=1 // pred_check_branch
      %1425 = sbr.rel (0) target = $region29
    $region28: #{diffcdr_forward.1} parent=1 // pred_region
      %1427 = vsyncadd [#allocation4], 0
      %s1429 = sshll.u32 [#allocation7], 4
      %s1430 = int_to_ptr.vmem [resolvable:$true] %s1429
      %s1431 = sshll.u32 %s4, 4
      %s1432 = int_to_ptr.hbm [resolvable:$true] %s1431
      %1434 = dma.vmem_to_hbm [thread:$0]  %s1430, 128, %s1432, [#allocation4]
    $region29: #{diffcdr_forward.1} parent=1 // pred_fallthru
      _
    // Predicated region
    $region30: #{diffcdr_forward.1} parent=1 // pred_check
      _
    $region31: #{diffcdr_forward.1} parent=1 // pred_check_branch
      %1436 = sbr.rel (0) target = $region33
    $region32: #{diffcdr_forward.1} parent=1 // pred_region
      %1438 = dma.done [#allocation4], 128
    $region33: #{diffcdr_forward.1} parent=1 // pred_fallthru
      _
    %1439 = vsyncpa [#allocation3], 1
    %1440 = vsyncpa [#allocation6], 1
    %1441 = vsyncpa [#allocation4], 1

</llo_original>
